<compile_context>
chip_gen: v5e
topology: v5e:2x2
jax: 0.10.0
libtpu: 0.0.40
codegen_flags: <defaults>
</compile_context>

<pallas_src>
import functools

import jax
import jax.numpy as jnp
from jax import lax
from jax.experimental import pallas as pl
from jax.experimental.pallas import tpu as pltpu


def _round_up(x, m):
    return ((x + m - 1) // m) * m


def _const_spec(shape):
    """Full-array block, constant index map, single-buffered (never re-DMA'd)."""
    idx = lambda t: (0,) * len(shape)
    try:
        return pl.BlockSpec(shape, idx, pipeline_mode=pl.Buffered(1))
    except (TypeError, AttributeError):   # older jax without pipeline_mode
        return pl.BlockSpec(shape, idx)


def _make_kernel(n_enc, n_dec, tt, t_total, b_pad, h_pad, d_pad, mem_steps,
                 w_dtype):
    """One grid step = TT recurrent LSTM steps + batched enc/dec MLPs."""
    n_in = 6 + 2 * (n_enc + n_dec)
    needs_mask = (t_total % tt) != 0        # last block has padded time steps

    def kernel(*refs):
        h0_ref, c0_ref, m0_ref, z_ref, wcat_ref, bg_ref = refs[:6]
        enc_refs = refs[6:6 + 2 * n_enc]
        dec_refs = refs[6 + 2 * n_enc:n_in]
        h_out, c_out, m_out, lat_out, dlt_out = refs[n_in:n_in + 5]
        h_stash, m_stash = refs[n_in + 5:]

        tb = pl.program_id(0)

        # Load the carried state into the VMEM-resident output blocks once.
        @pl.when(tb == 0)
        def _():
            h_out[...] = h0_ref[...]
            c_out[...] = c0_ref[...]
            m_out[...] = m0_ref[...]

        # Hoist weight loads out of the recurrent loop.
        wcat = wcat_ref[...]                          # (D_pad+H_pad, 4*H_pad) bf16
        bg = bg_ref[...]                              # (1, 4*H_pad) f32

        def step(s, carry):
            h, c, mem = carry
            row = pl.multiple_of(s * b_pad, 8)
            z = z_ref[pl.ds(row, b_pad), :]           # (B_pad, D_pad) f32

            # ---- rolling memory (newest obs in lanes [0, D_pad)) ------------
            mem_new = jnp.concatenate(
                [z, mem[:, :(mem_steps - 1) * d_pad]], axis=-1)

            # ---- fused LSTM cell, gate layout [i, f, o, g] ------------------
            zh = jnp.concatenate([z, h], axis=-1).astype(w_dtype)
            gates = (jnp.dot(zh, wcat, preferred_element_type=jnp.float32)
                     + bg)
            sig = jax.nn.sigmoid(gates[:, :3 * h_pad])     # i, f, o in one slab
            i_g = sig[:, 0 * h_pad:1 * h_pad]
            f_g = sig[:, 1 * h_pad:2 * h_pad]
            o_g = sig[:, 2 * h_pad:3 * h_pad]
            g_g = jnp.tanh(gates[:, 3 * h_pad:4 * h_pad])
            c_new = f_g * c + i_g * g_g
            h_new = o_g * jnp.tanh(c_new)

            # Stash per-step h / memory for the time-batched MLPs below.
            h_stash[pl.ds(row, b_pad), :] = h_new
            m_stash[pl.ds(row, b_pad), :] = mem_new

            if needs_mask:
                # Padded time steps must not advance the carried state.
                keep = (tb * tt + s < t_total).astype(jnp.float32)
                h_new = keep * h_new + (1.0 - keep) * h
                c_new = keep * c_new + (1.0 - keep) * c
                mem_new = keep * mem_new + (1.0 - keep) * mem
            return h_new, c_new, mem_new

        h_fin, c_fin, m_fin = lax.fori_loop(
            0, tt, step, (h_out[...], c_out[...], m_out[...]),
            unroll=(tt <= 8))
        h_out[...] = h_fin
        c_out[...] = c_fin
        m_out[...] = m_fin

        # ---- enc_mlp, batched over (TT*B_pad) rows ---------------------------
        x = h_stash[...]                                       # (TT*B_pad, H_pad)
        for li in range(n_enc):
            w = enc_refs[2 * li][...]
            b = enc_refs[2 * li + 1][...]
            x = jnp.dot(x.astype(w_dtype), w,
                        preferred_element_type=jnp.float32) + b
            if li < n_enc - 1:
                x = jnp.maximum(x, 0.0)
        lat_out[...] = x                                       # (TT*B_pad, L_pad)

        # ---- dec_mlp, batched over (TT*B_pad) rows ---------------------------
        y = x
        for li in range(n_dec):
            w = dec_refs[2 * li][...]
            b = dec_refs[2 * li + 1][...]
            y = jnp.dot(y.astype(w_dtype), w,
                        preferred_element_type=jnp.float32) + b
            if li < n_dec - 1:
                y = jnp.maximum(y, 0.0)

        # Delta against the (slot-padded) memory AFTER inserting the current z.
        dlt_out[...] = y - m_stash[...]

    return kernel


@functools.partial(jax.jit, static_argnums=(0,))
def _lstm_forward_sequence(dims, z_seq, h0, c0, m0, wcat, bgate,
                           enc_params, dec_params):
    """Runs T timesteps in a single pallas_call (time-blocked grid)."""
    input_dim, latent_dim, mem_steps = dims
    B, T, _ = z_seq.shape
    B_pad, H_pad = h0.shape
    D_pad = m0.shape[1] // mem_steps
    L_pad = enc_params[-1].shape[-1]
    R_pad = dec_params[-1].shape[-1]
    n_enc = len(enc_params) // 2
    n_dec = len(dec_params) // 2

    # Time blocking: TT recurrent steps per grid iteration.
    TT = min(8, T)
    n_blocks = int(pl.cdiv(T, TT))
    T_pad = n_blocks * TT

    # (B, T, D) -> (T_pad*B_pad, D_pad), zero padded, time-major rows.
    z_tbd = jnp.transpose(z_seq.astype(jnp.float32), (1, 0, 2))
    z_p = jnp.pad(z_tbd, ((0, T_pad - T), (0, B_pad - B),
                          (0, D_pad - input_dim)))
    z_p = z_p.reshape(T_pad * B_pad, D_pad)

    in_specs = [
        _const_spec((B_pad, H_pad)),                           # h0
        _const_spec((B_pad, H_pad)),                           # c0
        _const_spec((B_pad, mem_steps * D_pad)),               # memory
        pl.BlockSpec((TT * B_pad, D_pad), lambda t: (t, 0)),   # z, time block
        _const_spec(wcat.shape),                               # fused gate W
        _const_spec(bgate.shape),                              # fused gate b
    ]
    for p in enc_params:
        in_specs.append(_const_spec(p.shape))
    for p in dec_params:
        in_specs.append(_const_spec(p.shape))

    out_specs = (
        pl.BlockSpec((B_pad, H_pad), lambda t: (0, 0)),        # h_T
        pl.BlockSpec((B_pad, H_pad), lambda t: (0, 0)),        # c_T
        pl.BlockSpec((B_pad, mem_steps * D_pad), lambda t: (0, 0)),  # memory_T
        pl.BlockSpec((TT * B_pad, L_pad), lambda t: (t, 0)),   # latents
        pl.BlockSpec((TT * B_pad, R_pad), lambda t: (t, 0)),   # deltas
    )
    out_shape = (
        jax.ShapeDtypeStruct((B_pad, H_pad), jnp.float32),
        jax.ShapeDtypeStruct((B_pad, H_pad), jnp.float32),
        jax.ShapeDtypeStruct((B_pad, mem_steps * D_pad), jnp.float32),
        jax.ShapeDtypeStruct((T_pad * B_pad, L_pad), jnp.float32),
        jax.ShapeDtypeStruct((T_pad * B_pad, R_pad), jnp.float32),
    )

    kernel = _make_kernel(n_enc, n_dec, TT, T, B_pad, H_pad, D_pad, mem_steps,
                          wcat.dtype)

    h_n, c_n, m_n, lat_p, dlt_p = pl.pallas_call(
        kernel,
        out_shape=out_shape,
        grid_spec=pltpu.PrefetchScalarGridSpec(
            num_scalar_prefetch=0,
            grid=(n_blocks,),
            in_specs=in_specs,
            out_specs=out_specs,
            scratch_shapes=[
                pltpu.VMEM((TT * B_pad, H_pad), jnp.float32),          # h stash
                pltpu.VMEM((TT * B_pad, mem_steps * D_pad), jnp.float32),  # mem stash
            ]),
        # In-place state update: h/c/memory inputs aliased to outputs.
        input_output_aliases={0: 0, 1: 1, 2: 2},
        compiler_params=pltpu.CompilerParams(
            dimension_semantics=("arbitrary",),          # sequential recurrence
            vmem_limit_bytes=32 * 1024 * 1024),
    )(h0, c0, m0, z_p, wcat, bgate, *enc_params, *dec_params)

    lat_p = lat_p.reshape(T_pad, B_pad, L_pad)
    dlt_p = dlt_p.reshape(T_pad, B_pad, R_pad)
    latents = lat_p[:T, :B, :latent_dim]
    deltas = dlt_p[:T, :B, :].reshape(T, B, mem_steps, D_pad)[..., :input_dim]
    deltas = deltas.reshape(T, B, mem_steps * input_dim)
    return h_n, c_n, m_n, latents, deltas


class LSTMPallas:
    """Functional re-implementation of the PyTorch LSTM module."""

    LANE = 128
    SUBLANE = 8

    def __init__(self, input_dim, latent_dim, d_model, enc_hidden_dims,
                 dec_hidden_dims, memory_steps_threshold=4, key=None):
        self.clock = 0
        self.d_model = d_model
        self.memory_steps = memory_steps_threshold
        self.input_dim = input_dim
        self.latent_dim = latent_dim

        self.D_pad = _round_up(input_dim, self.LANE)
        self.H_pad = _round_up(d_model, self.LANE)
        self.L_pad = _round_up(latent_dim, self.LANE)

        if key is None:
            key = jax.random.PRNGKey(0)
        n_keys = 4 + 2 * (len(enc_hidden_dims) + len(dec_hidden_dims) + 2)
        keys = iter(jax.random.split(key, n_keys))

        def uni(shape, scale):
            return jax.random.uniform(next(keys), shape, jnp.float32,
                                      -scale, scale)

        H, D = d_model, input_dim
        k = 1.0 / (d_model ** 0.5)
        w_ih = uni((4 * H, D), k)          # PyTorch layout (4H, D), order i,f,g,o
        w_hh = uni((4 * H, H), k)
        b_ih = uni((4 * H,), k)
        b_hh = uni((4 * H,), k)

        # Fused, lane-padded gate weight: [z ‖ h] @ W_cat.
        # Kernel gate-slab order is [i, f, o, g] (3 sigmoid slabs + 1 tanh slab).
        wcat = jnp.zeros((self.D_pad + self.H_pad, 4 * self.H_pad), jnp.float32)
        bgate = jnp.zeros((1, 4 * self.H_pad), jnp.float32)
        gate_order = (0, 1, 3, 2)          # pytorch [i,f,g,o] -> slabs [i,f,o,g]
        for slab, g in enumerate(gate_order):
            c0, c1 = slab * self.H_pad, slab * self.H_pad + H
            wcat = wcat.at[:D, c0:c1].set(w_ih[g * H:(g + 1) * H, :].T)
            wcat = wcat.at[self.D_pad:self.D_pad + H, c0:c1].set(
                w_hh[g * H:(g + 1) * H, :].T)
            bgate = bgate.at[0, c0:c1].set(
                b_ih[g * H:(g + 1) * H] + b_hh[g * H:(g + 1) * H])
        self.wcat = wcat.astype(jnp.bfloat16)     # bf16 weights, f32 accumulate
        self.bgate = bgate                        # bias stays f32

        def make_mlp(dims, dims_pad, last_slot_layout):
            params = []
            n = len(dims) - 1
            for li in range(n):
                din, dout = dims[li], dims[li + 1]
                dinp, doutp = dims_pad[li], dims_pad[li + 1]
                s = 1.0 / (din ** 0.5)
                w = uni((din, dout), s)            # stored transposed: y = x@w+b
                b = uni((dout,), s)
                if last_slot_layout and li == n - 1:
                    # Remap output column s*D+j -> s*D_pad+j so flattened recon
                    # lines up with the lane-padded memory buffer.
                    M = self.memory_steps
                    wp = jnp.zeros((dinp, M, self.D_pad), jnp.float32)
                    wp = wp.at[:din, :, :D].set(w.reshape(din, M, D))
                    wp = wp.reshape(dinp, M * self.D_pad)
                    bp = jnp.zeros((1, M, self.D_pad), jnp.float32)
                    bp = bp.at[0, :, :D].set(b.reshape(M, D))
                    bp = bp.reshape(1, M * self.D_pad)
                else:
                    wp = jnp.zeros((dinp, doutp), jnp.float32)
                    wp = wp.at[:din, :dout].set(w)
                    bp = jnp.zeros((1, doutp), jnp.float32)
                    bp = bp.at[0, :dout].set(b)
                params += [wp.astype(jnp.bfloat16), bp]
            return tuple(params)

        enc_dims = [d_model] + list(enc_hidden_dims) + [latent_dim]
        enc_dims_pad = ([self.H_pad]
                        + [_round_up(h, self.LANE) for h in enc_hidden_dims]
                        + [self.L_pad])
        dec_dims = ([latent_dim] + list(dec_hidden_dims)
                    + [input_dim * self.memory_steps])
        dec_dims_pad = ([self.L_pad]
                        + [_round_up(h, self.LANE) for h in dec_hidden_dims]
                        + [self.memory_steps * self.D_pad])
        self.enc_params = make_mlp(enc_dims, enc_dims_pad, False)
        self.dec_params = make_mlp(dec_dims, dec_dims_pad, True)

        self.batch = None
        self.B_pad = None
        self.h_t = None
        self.c_t = None
        self.memory = None

    def init_states(self, batch_size):
        self.batch = batch_size
        self.B_pad = _round_up(max(batch_size, 1), self.SUBLANE)
        self.h_t = jnp.zeros((self.B_pad, self.H_pad), jnp.float32)
        self.c_t = jnp.zeros((self.B_pad, self.H_pad), jnp.float32)
        self.memory = jnp.zeros(
            (self.B_pad, self.memory_steps * self.D_pad), jnp.float32)
        self.clock = 0

    def forward_sequence(self, z_seq):
        """z_seq: (B, T, input_dim), batch_first.

        Returns (latents (T, B, latent_dim), deltas (T, B, memory_steps*input_dim)).
        For steps where clock < memory_steps only the first input_dim*clock
        delta columns are meaningful (the single-step `forward` slices them).
        """
        assert self.h_t is not None, "call init_states() first"
        B, T, _ = z_seq.shape
        assert B == self.batch
        dims = (self.input_dim, self.latent_dim, self.memory_steps)
        h_n, c_n, m_n, latents, deltas = _lstm_forward_sequence(
            dims, jnp.asarray(z_seq, jnp.float32),
            self.h_t, self.c_t, self.memory,
            self.wcat, self.bgate, self.enc_params, self.dec_params)
        self.h_t, self.c_t, self.memory = h_n, c_n, m_n
        self.clock += T
        return latents, deltas

    def forward(self, z_t):
        """Single-step forward, matching the PyTorch module semantics."""
        z = jnp.asarray(z_t, jnp.float32)
        if z.ndim == 3:
            # TODO(synk): only seq_len==1 supported (module's memory update implies it)
            assert z.shape[1] == 1
            z = z[:, 0, :]
        latents, deltas = self.forward_sequence(z[:, None, :])
        latent = latents[0]
        delta_full = deltas[0]
        if self.clock >= self.memory_steps:
            delta = delta_full
        else:
            delta = delta_full[:, : self.input_dim * self.clock]
        return latent, delta


if __name__ == "__main__":
    B = 2
    input_dim = 4
    latent_dim = 8
    d_model = 32
    enc_hidden_dims = [32]
    dec_hidden_dims = [32]
    memory_steps = 4

    key = jax.random.PRNGKey(0)
    k_model, k_data = jax.random.split(key)

    model = LSTMPallas(input_dim, latent_dim, d_model, enc_hidden_dims,
                       dec_hidden_dims, memory_steps_threshold=memory_steps,
                       key=k_model)
    model.init_states(B)

    steps = 20
    zs = jax.random.normal(k_data, (B, steps, input_dim), jnp.float32)

    # First two steps one at a time: exercises the clock < memory_steps
    # partial-delta branch and the T=1 (single-block) kernel variant.
    for t in range(2):
        latent, delta = model.forward(zs[:, t, :])
        assert latent.shape == (B, latent_dim)
        assert delta.shape == (B, input_dim * model.clock)
        assert bool(jnp.all(jnp.isfinite(latent)))
        assert bool(jnp.all(jnp.isfinite(delta)))

    # Remaining 18 steps fused into ONE pallas_call: grid of 3 time blocks of
    # TT=8 (last block partially masked), batched MLPs over 64 rows per block.
    latents, deltas = model.forward_sequence(zs[:, 2:, :])
    latents = jax.block_until_ready(latents)
    deltas = jax.block_until_ready(deltas)

    latent = latents[-1]
    delta = deltas[-1]

    assert latents.shape == (steps - 2, B, latent_dim)
    assert deltas.shape == (steps - 2, B, input_dim * memory_steps)
    assert latent.shape == (B, latent_dim)
    assert delta.shape == (B, input_dim * memory_steps)
    assert bool(jnp.all(jnp.isfinite(latents)))
    assert bool(jnp.all(jnp.isfinite(deltas)))

    print("KERNEL_OK")
</pallas_src>

<mosaic_0001>
module attributes {stable_mosaic.version = 11 : i64} {
  func.func @kernel(%arg0: i32, %arg1: memref<8x128xf32, #tpu.memory_space<vmem>>, %arg2: memref<8x128xf32, #tpu.memory_space<vmem>>, %arg3: memref<8x512xf32, #tpu.memory_space<vmem>>, %arg4: memref<8x128xf32, #tpu.memory_space<vmem>>, %arg5: memref<256x512xbf16, #tpu.memory_space<vmem>>, %arg6: memref<1x512xf32, #tpu.memory_space<vmem>>, %arg7: memref<128x128xbf16, #tpu.memory_space<vmem>>, %arg8: memref<1x128xf32, #tpu.memory_space<vmem>>, %arg9: memref<128x128xbf16, #tpu.memory_space<vmem>>, %arg10: memref<1x128xf32, #tpu.memory_space<vmem>>, %arg11: memref<128x128xbf16, #tpu.memory_space<vmem>>, %arg12: memref<1x128xf32, #tpu.memory_space<vmem>>, %arg13: memref<128x512xbf16, #tpu.memory_space<vmem>>, %arg14: memref<1x512xf32, #tpu.memory_space<vmem>>, %arg15: memref<8x128xf32, #tpu.memory_space<vmem>>, %arg16: memref<8x128xf32, #tpu.memory_space<vmem>>, %arg17: memref<8x512xf32, #tpu.memory_space<vmem>>, %arg18: memref<8x128xf32, #tpu.memory_space<vmem>>, %arg19: memref<8x512xf32, #tpu.memory_space<vmem>>, %arg20: memref<8x128xf32, #tpu.memory_space<vmem>>, %arg21: memref<8x512xf32, #tpu.memory_space<vmem>>) attributes {dimension_semantics = [#tpu.dimension_semantics<arbitrary>], iteration_bounds = array<i64: 1>, scalar_prefetch = 0 : i64, scratch_operands = 2 : i64, tpu.core_type = #tpu.core_type<tc>, window_params = [{pipeline_mode = #tpu.pipeline_mode<synchronous>, transform_indices = @transform_0, window_bounds = array<i64: 8, 128>}, {pipeline_mode = #tpu.pipeline_mode<synchronous>, transform_indices = @transform_1, window_bounds = array<i64: 8, 128>}, {pipeline_mode = #tpu.pipeline_mode<synchronous>, transform_indices = @transform_2, window_bounds = array<i64: 8, 512>}, {transform_indices = @transform_3, window_bounds = array<i64: 8, 128>}, {pipeline_mode = #tpu.pipeline_mode<synchronous>, transform_indices = @transform_4, window_bounds = array<i64: 256, 512>}, {pipeline_mode = #tpu.pipeline_mode<synchronous>, transform_indices = @transform_5, window_bounds = array<i64: 1, 512>}, {pipeline_mode = #tpu.pipeline_mode<synchronous>, transform_indices = @transform_6, window_bounds = array<i64: 128, 128>}, {pipeline_mode = #tpu.pipeline_mode<synchronous>, transform_indices = @transform_7, window_bounds = array<i64: 1, 128>}, {pipeline_mode = #tpu.pipeline_mode<synchronous>, transform_indices = @transform_8, window_bounds = array<i64: 128, 128>}, {pipeline_mode = #tpu.pipeline_mode<synchronous>, transform_indices = @transform_9, window_bounds = array<i64: 1, 128>}, {pipeline_mode = #tpu.pipeline_mode<synchronous>, transform_indices = @transform_10, window_bounds = array<i64: 128, 128>}, {pipeline_mode = #tpu.pipeline_mode<synchronous>, transform_indices = @transform_11, window_bounds = array<i64: 1, 128>}, {pipeline_mode = #tpu.pipeline_mode<synchronous>, transform_indices = @transform_12, window_bounds = array<i64: 128, 512>}, {pipeline_mode = #tpu.pipeline_mode<synchronous>, transform_indices = @transform_13, window_bounds = array<i64: 1, 512>}, {pipeline_mode = #tpu.pipeline_mode<synchronous>, transform_indices = @transform_14, window_bounds = array<i64: 8, 128>}, {pipeline_mode = #tpu.pipeline_mode<synchronous>, transform_indices = @transform_15, window_bounds = array<i64: 8, 128>}, {pipeline_mode = #tpu.pipeline_mode<synchronous>, transform_indices = @transform_16, window_bounds = array<i64: 8, 512>}, {transform_indices = @transform_17, window_bounds = array<i64: 8, 128>}, {transform_indices = @transform_18, window_bounds = array<i64: 8, 512>}]} {
    %c0_i32 = arith.constant 0 : i32
    %0 = arith.cmpi eq, %arg0, %c0_i32 : i32
    %1 = arith.extui %0 : i1 to i32
    %c0_i32_0 = arith.constant 0 : i32
    %2 = arith.cmpi ne, %1, %c0_i32_0 : i32
    scf.if %2 {
      %c0_51 = arith.constant 0 : index
      %c0_52 = arith.constant 0 : index
      %75 = vector.load %arg1[%c0_51, %c0_52] : memref<8x128xf32, #tpu.memory_space<vmem>>, vector<8x128xf32>
      %c0_53 = arith.constant 0 : index
      %c0_54 = arith.constant 0 : index
      %76 = vector.load %arg15[%c0_53, %c0_54] : memref<8x128xf32, #tpu.memory_space<vmem>>, vector<8x128xf32>
      tpu.vector_store %arg15[%c0_53, %c0_54], %75 {strides = array<i32>} : memref<8x128xf32, #tpu.memory_space<vmem>>, vector<8x128xf32>,
      %c0_55 = arith.constant 0 : index
      %c0_56 = arith.constant 0 : index
      %77 = vector.load %arg2[%c0_55, %c0_56] : memref<8x128xf32, #tpu.memory_space<vmem>>, vector<8x128xf32>
      %c0_57 = arith.constant 0 : index
      %c0_58 = arith.constant 0 : index
      %78 = vector.load %arg16[%c0_57, %c0_58] : memref<8x128xf32, #tpu.memory_space<vmem>>, vector<8x128xf32>
      tpu.vector_store %arg16[%c0_57, %c0_58], %77 {strides = array<i32>} : memref<8x128xf32, #tpu.memory_space<vmem>>, vector<8x128xf32>,
      %c0_59 = arith.constant 0 : index
      %c0_60 = arith.constant 0 : index
      %79 = vector.load %arg3[%c0_59, %c0_60] : memref<8x512xf32, #tpu.memory_space<vmem>>, vector<8x512xf32>
      %c0_61 = arith.constant 0 : index
      %c0_62 = arith.constant 0 : index
      %80 = vector.load %arg17[%c0_61, %c0_62] : memref<8x512xf32, #tpu.memory_space<vmem>>, vector<8x512xf32>
      tpu.vector_store %arg17[%c0_61, %c0_62], %79 {strides = array<i32>} : memref<8x512xf32, #tpu.memory_space<vmem>>, vector<8x512xf32>,
    } else {
    }
    %c0 = arith.constant 0 : index
    %c0_1 = arith.constant 0 : index
    %3 = vector.load %arg5[%c0, %c0_1] : memref<256x512xbf16, #tpu.memory_space<vmem>>, vector<256x512xbf16>
    %c0_2 = arith.constant 0 : index
    %c0_3 = arith.constant 0 : index
    %4 = vector.load %arg6[%c0_2, %c0_3] : memref<1x512xf32, #tpu.memory_space<vmem>>, vector<1x512xf32>
    %c0_4 = arith.constant 0 : index
    %c0_5 = arith.constant 0 : index
    %5 = vector.load %arg15[%c0_4, %c0_5] : memref<8x128xf32, #tpu.memory_space<vmem>>, vector<8x128xf32>
    %c0_6 = arith.constant 0 : index
    %c0_7 = arith.constant 0 : index
    %6 = vector.load %arg16[%c0_6, %c0_7] : memref<8x128xf32, #tpu.memory_space<vmem>>, vector<8x128xf32>
    %c0_8 = arith.constant 0 : index
    %c0_9 = arith.constant 0 : index
    %7 = vector.load %arg17[%c0_8, %c0_9] : memref<8x512xf32, #tpu.memory_space<vmem>>, vector<8x512xf32>
    %c0_i32_10 = arith.constant 0 : i32
    %c8_i32 = arith.constant 8 : i32
    %8 = arith.muli %c0_i32_10, %c8_i32 : i32
    %9 = tpu.assume_multiple %8, 8 : i32
    %10 = arith.index_cast %9 : i32 to index
    %c0_11 = arith.constant 0 : index
    %11 = vector.load %arg4[%10, %c0_11] : memref<8x128xf32, #tpu.memory_space<vmem>>, vector<8x128xf32>
    %12 = vector.extract_strided_slice %7 {offsets = [0, 0], sizes = [8, 384], strides = [1, 1]} : vector<8x512xf32> to vector<8x384xf32>
    %13 = tpu.concatenate %11, %12 in 1 : vector<8x128xf32>, vector<8x384xf32> -> vector<8x512xf32>
    %14 = tpu.concatenate %11, %5 in 1 : vector<8x128xf32>, vector<8x128xf32> -> vector<8x256xf32>
    %15 = arith.truncf %14 : vector<8x256xf32> to vector<8x256xbf16>
    %cst = arith.constant dense<0.000000e+00> : vector<8x512xf32>
    %16 = tpu.matmul %15, %3, %cst {dimension_numbers = #tpu.dot_dimension_numbers<[1], [0], [0], [1], [0, 0, 1, 1], [], []>} : vector<8x256xbf16>, vector<256x512xbf16>, vector<8x512xf32> -> vector<8x512xf32>
    %17 = vector.broadcast %4 : vector<1x512xf32> to vector<8x512xf32>
    %18 = arith.addf %16, %17 : vector<8x512xf32>
    %19 = vector.extract_strided_slice %18 {offsets = [0, 0], sizes = [8, 384], strides = [1, 1]} : vector<8x512xf32> to vector<8x384xf32>
    %20 = arith.negf %19 : vector<8x384xf32>
    %21 = math.exp %20 : vector<8x384xf32>
    %cst_12 = arith.constant 1.000000e+00 : f32
    %22 = vector.broadcast %cst_12 : f32 to vector<8x384xf32>
    %23 = arith.addf %22, %21 : vector<8x384xf32>
    %24 = arith.divf %22, %23 : vector<8x384xf32>
    %25 = vector.extract_strided_slice %24 {offsets = [0, 0], sizes = [8, 128], strides = [1, 1]} : vector<8x384xf32> to vector<8x128xf32>
    %26 = vector.extract_strided_slice %24 {offsets = [0, 128], sizes = [8, 128], strides = [1, 1]} : vector<8x384xf32> to vector<8x128xf32>
    %27 = vector.extract_strided_slice %24 {offsets = [0, 256], sizes = [8, 128], strides = [1, 1]} : vector<8x384xf32> to vector<8x128xf32>
    %28 = vector.extract_strided_slice %18 {offsets = [0, 384], sizes = [8, 128], strides = [1, 1]} : vector<8x512xf32> to vector<8x128xf32>
    %29 = math.tanh %28 : vector<8x128xf32>
    %30 = arith.mulf %26, %6 : vector<8x128xf32>
    %31 = arith.mulf %25, %29 : vector<8x128xf32>
    %32 = arith.addf %30, %31 : vector<8x128xf32>
    %33 = math.tanh %32 : vector<8x128xf32>
    %34 = arith.mulf %27, %33 : vector<8x128xf32>
    %35 = arith.index_cast %9 : i32 to index
    %c0_13 = arith.constant 0 : index
    %36 = vector.load %arg20[%35, %c0_13] : memref<8x128xf32, #tpu.memory_space<vmem>>, vector<8x128xf32>
    tpu.vector_store %arg20[%35, %c0_13], %34 {strides = array<i32>} : memref<8x128xf32, #tpu.memory_space<vmem>>, vector<8x128xf32>,
    %37 = arith.index_cast %9 : i32 to index
    %c0_14 = arith.constant 0 : index
    %38 = vector.load %arg21[%37, %c0_14] : memref<8x512xf32, #tpu.memory_space<vmem>>, vector<8x512xf32>
    tpu.vector_store %arg21[%37, %c0_14], %13 {strides = array<i32>} : memref<8x512xf32, #tpu.memory_space<vmem>>, vector<8x512xf32>,
    %c1_i32 = arith.constant 1 : i32
    %c0_15 = arith.constant 0 : index
    %c0_16 = arith.constant 0 : index
    %39 = vector.load %arg15[%c0_15, %c0_16] : memref<8x128xf32, #tpu.memory_space<vmem>>, vector<8x128xf32>
    tpu.vector_store %arg15[%c0_15, %c0_16], %34 {strides = array<i32>} : memref<8x128xf32, #tpu.memory_space<vmem>>, vector<8x128xf32>,
    %c0_17 = arith.constant 0 : index
    %c0_18 = arith.constant 0 : index
    %40 = vector.load %arg16[%c0_17, %c0_18] : memref<8x128xf32, #tpu.memory_space<vmem>>, vector<8x128xf32>
    tpu.vector_store %arg16[%c0_17, %c0_18], %32 {strides = array<i32>} : memref<8x128xf32, #tpu.memory_space<vmem>>, vector<8x128xf32>,
    %c0_19 = arith.constant 0 : index
    %c0_20 = arith.constant 0 : index
    %41 = vector.load %arg17[%c0_19, %c0_20] : memref<8x512xf32, #tpu.memory_space<vmem>>, vector<8x512xf32>
    tpu.vector_store %arg17[%c0_19, %c0_20], %13 {strides = array<i32>} : memref<8x512xf32, #tpu.memory_space<vmem>>, vector<8x512xf32>,
    %c0_21 = arith.constant 0 : index
    %c0_22 = arith.constant 0 : index
    %42 = vector.load %arg20[%c0_21, %c0_22] : memref<8x128xf32, #tpu.memory_space<vmem>>, vector<8x128xf32>
    %c0_23 = arith.constant 0 : index
    %c0_24 = arith.constant 0 : index
    %43 = vector.load %arg7[%c0_23, %c0_24] : memref<128x128xbf16, #tpu.memory_space<vmem>>, vector<128x128xbf16>
    %c0_25 = arith.constant 0 : index
    %c0_26 = arith.constant 0 : index
    %44 = vector.load %arg8[%c0_25, %c0_26] : memref<1x128xf32, #tpu.memory_space<vmem>>, vector<1x128xf32>
    %45 = arith.truncf %42 : vector<8x128xf32> to vector<8x128xbf16>
    %cst_27 = arith.constant dense<0.000000e+00> : vector<8x128xf32>
    %46 = tpu.matmul %45, %43, %cst_27 {dimension_numbers = #tpu.dot_dimension_numbers<[1], [0], [0], [1], [0, 0, 1, 1], [], []>} : vector<8x128xbf16>, vector<128x128xbf16>, vector<8x128xf32> -> vector<8x128xf32>
    %47 = vector.broadcast %44 : vector<1x128xf32> to vector<8x128xf32>
    %48 = arith.addf %46, %47 : vector<8x128xf32>
    %cst_28 = arith.constant 0.000000e+00 : f32
    %49 = vector.broadcast %cst_28 : f32 to vector<8x128xf32>
    %50 = arith.maximumf %48, %49 : vector<8x128xf32>
    %c0_29 = arith.constant 0 : index
    %c0_30 = arith.constant 0 : index
    %51 = vector.load %arg9[%c0_29, %c0_30] : memref<128x128xbf16, #tpu.memory_space<vmem>>, vector<128x128xbf16>
    %c0_31 = arith.constant 0 : index
    %c0_32 = arith.constant 0 : index
    %52 = vector.load %arg10[%c0_31, %c0_32] : memref<1x128xf32, #tpu.memory_space<vmem>>, vector<1x128xf32>
    %53 = arith.truncf %50 : vector<8x128xf32> to vector<8x128xbf16>
    %cst_33 = arith.constant dense<0.000000e+00> : vector<8x128xf32>
    %54 = tpu.matmul %53, %51, %cst_33 {dimension_numbers = #tpu.dot_dimension_numbers<[1], [0], [0], [1], [0, 0, 1, 1], [], []>} : vector<8x128xbf16>, vector<128x128xbf16>, vector<8x128xf32> -> vector<8x128xf32>
    %55 = vector.broadcast %52 : vector<1x128xf32> to vector<8x128xf32>
    %56 = arith.addf %54, %55 : vector<8x128xf32>
    %c0_34 = arith.constant 0 : index
    %c0_35 = arith.constant 0 : index
    %57 = vector.load %arg18[%c0_34, %c0_35] : memref<8x128xf32, #tpu.memory_space<vmem>>, vector<8x128xf32>
    tpu.vector_store %arg18[%c0_34, %c0_35], %56 {strides = array<i32>} : memref<8x128xf32, #tpu.memory_space<vmem>>, vector<8x128xf32>,
    %c0_36 = arith.constant 0 : index
    %c0_37 = arith.constant 0 : index
    %58 = vector.load %arg11[%c0_36, %c0_37] : memref<128x128xbf16, #tpu.memory_space<vmem>>, vector<128x128xbf16>
    %c0_38 = arith.constant 0 : index
    %c0_39 = arith.constant 0 : index
    %59 = vector.load %arg12[%c0_38, %c0_39] : memref<1x128xf32, #tpu.memory_space<vmem>>, vector<1x128xf32>
    %60 = arith.truncf %56 : vector<8x128xf32> to vector<8x128xbf16>
    %cst_40 = arith.constant dense<0.000000e+00> : vector<8x128xf32>
    %61 = tpu.matmul %60, %58, %cst_40 {dimension_numbers = #tpu.dot_dimension_numbers<[1], [0], [0], [1], [0, 0, 1, 1], [], []>} : vector<8x128xbf16>, vector<128x128xbf16>, vector<8x128xf32> -> vector<8x128xf32>
    %62 = vector.broadcast %59 : vector<1x128xf32> to vector<8x128xf32>
    %63 = arith.addf %61, %62 : vector<8x128xf32>
    %cst_41 = arith.constant 0.000000e+00 : f32
    %64 = vector.broadcast %cst_41 : f32 to vector<8x128xf32>
    %65 = arith.maximumf %63, %64 : vector<8x128xf32>
    %c0_42 = arith.constant 0 : index
    %c0_43 = arith.constant 0 : index
    %66 = vector.load %arg13[%c0_42, %c0_43] : memref<128x512xbf16, #tpu.memory_space<vmem>>, vector<128x512xbf16>
    %c0_44 = arith.constant 0 : index
    %c0_45 = arith.constant 0 : index
    %67 = vector.load %arg14[%c0_44, %c0_45] : memref<1x512xf32, #tpu.memory_space<vmem>>, vector<1x512xf32>
    %68 = arith.truncf %65 : vector<8x128xf32> to vector<8x128xbf16>
    %cst_46 = arith.constant dense<0.000000e+00> : vector<8x512xf32>
    %69 = tpu.matmul %68, %66, %cst_46 {dimension_numbers = #tpu.dot_dimension_numbers<[1], [0], [0], [1], [0, 0, 1, 1], [], []>} : vector<8x128xbf16>, vector<128x512xbf16>, vector<8x512xf32> -> vector<8x512xf32>
    %70 = vector.broadcast %67 : vector<1x512xf32> to vector<8x512xf32>
    %71 = arith.addf %69, %70 : vector<8x512xf32>
    %c0_47 = arith.constant 0 : index
    %c0_48 = arith.constant 0 : index
    %72 = vector.load %arg21[%c0_47, %c0_48] : memref<8x512xf32, #tpu.memory_space<vmem>>, vector<8x512xf32>
    %73 = arith.subf %71, %72 : vector<8x512xf32>
    %c0_49 = arith.constant 0 : index
    %c0_50 = arith.constant 0 : index
    %74 = vector.load %arg19[%c0_49, %c0_50] : memref<8x512xf32, #tpu.memory_space<vmem>>, vector<8x512xf32>
    tpu.vector_store %arg19[%c0_49, %c0_50], %73 {strides = array<i32>} : memref<8x512xf32, #tpu.memory_space<vmem>>, vector<8x512xf32>,
    return
  }
  func.func @transform_0(%arg0: i32) -> (i32, i32) {
    %c0_i32 = arith.constant 0 : i32
    %c0_i32_0 = arith.constant 0 : i32
    %c0_i32_1 = arith.constant 0 : i32
    return %c0_i32, %c0_i32_0 : i32, i32
  }
  func.func @transform_1(%arg0: i32) -> (i32, i32) {
    %c0_i32 = arith.constant 0 : i32
    %c0_i32_0 = arith.constant 0 : i32
    %c0_i32_1 = arith.constant 0 : i32
    return %c0_i32, %c0_i32_0 : i32, i32
  }
  func.func @transform_2(%arg0: i32) -> (i32, i32) {
    %c0_i32 = arith.constant 0 : i32
    %c0_i32_0 = arith.constant 0 : i32
    %c0_i32_1 = arith.constant 0 : i32
    return %c0_i32, %c0_i32_0 : i32, i32
  }
  func.func @transform_3(%arg0: i32) -> (i32, i32) {
    %c0_i32 = arith.constant 0 : i32
    %c0_i32_0 = arith.constant 0 : i32
    return %arg0, %c0_i32 : i32, i32
  }
  func.func @transform_4(%arg0: i32) -> (i32, i32) {
    %c0_i32 = arith.constant 0 : i32
    %c0_i32_0 = arith.constant 0 : i32
    %c0_i32_1 = arith.constant 0 : i32
    return %c0_i32, %c0_i32_0 : i32, i32
  }
  func.func @transform_5(%arg0: i32) -> (i32, i32) {
    %c0_i32 = arith.constant 0 : i32
    %c0_i32_0 = arith.constant 0 : i32
    %c0_i32_1 = arith.constant 0 : i32
    return %c0_i32, %c0_i32_0 : i32, i32
  }
  func.func @transform_6(%arg0: i32) -> (i32, i32) {
    %c0_i32 = arith.constant 0 : i32
    %c0_i32_0 = arith.constant 0 : i32
    %c0_i32_1 = arith.constant 0 : i32
    return %c0_i32, %c0_i32_0 : i32, i32
  }
  func.func @transform_7(%arg0: i32) -> (i32, i32) {
    %c0_i32 = arith.constant 0 : i32
    %c0_i32_0 = arith.constant 0 : i32
    %c0_i32_1 = arith.constant 0 : i32
    return %c0_i32, %c0_i32_0 : i32, i32
  }
  func.func @transform_8(%arg0: i32) -> (i32, i32) {
    %c0_i32 = arith.constant 0 : i32
    %c0_i32_0 = arith.constant 0 : i32
    %c0_i32_1 = arith.constant 0 : i32
    return %c0_i32, %c0_i32_0 : i32, i32
  }
  func.func @transform_9(%arg0: i32) -> (i32, i32) {
    %c0_i32 = arith.constant 0 : i32
    %c0_i32_0 = arith.constant 0 : i32
    %c0_i32_1 = arith.constant 0 : i32
    return %c0_i32, %c0_i32_0 : i32, i32
  }
  func.func @transform_10(%arg0: i32) -> (i32, i32) {
    %c0_i32 = arith.constant 0 : i32
    %c0_i32_0 = arith.constant 0 : i32
    %c0_i32_1 = arith.constant 0 : i32
    return %c0_i32, %c0_i32_0 : i32, i32
  }
  func.func @transform_11(%arg0: i32) -> (i32, i32) {
    %c0_i32 = arith.constant 0 : i32
    %c0_i32_0 = arith.constant 0 : i32
    %c0_i32_1 = arith.constant 0 : i32
    return %c0_i32, %c0_i32_0 : i32, i32
  }
  func.func @transform_12(%arg0: i32) -> (i32, i32) {
    %c0_i32 = arith.constant 0 : i32
    %c0_i32_0 = arith.constant 0 : i32
    %c0_i32_1 = arith.constant 0 : i32
    return %c0_i32, %c0_i32_0 : i32, i32
  }
  func.func @transform_13(%arg0: i32) -> (i32, i32) {
    %c0_i32 = arith.constant 0 : i32
    %c0_i32_0 = arith.constant 0 : i32
    %c0_i32_1 = arith.constant 0 : i32
    return %c0_i32, %c0_i32_0 : i32, i32
  }
  func.func @transform_14(%arg0: i32) -> (i32, i32) {
    %c0_i32 = arith.constant 0 : i32
    %c0_i32_0 = arith.constant 0 : i32
    %c0_i32_1 = arith.constant 0 : i32
    return %c0_i32, %c0_i32_0 : i32, i32
  }
  func.func @transform_15(%arg0: i32) -> (i32, i32) {
    %c0_i32 = arith.constant 0 : i32
    %c0_i32_0 = arith.constant 0 : i32
    %c0_i32_1 = arith.constant 0 : i32
    return %c0_i32, %c0_i32_0 : i32, i32
  }
  func.func @transform_16(%arg0: i32) -> (i32, i32) {
    %c0_i32 = arith.constant 0 : i32
    %c0_i32_0 = arith.constant 0 : i32
    %c0_i32_1 = arith.constant 0 : i32
    return %c0_i32, %c0_i32_0 : i32, i32
  }
  func.func @transform_17(%arg0: i32) -> (i32, i32) {
    %c0_i32 = arith.constant 0 : i32
    %c0_i32_0 = arith.constant 0 : i32
    return %arg0, %c0_i32 : i32, i32
  }
  func.func @transform_18(%arg0: i32) -> (i32, i32) {
    %c0_i32 = arith.constant 0 : i32
    %c0_i32_0 = arith.constant 0 : i32
    return %arg0, %c0_i32 : i32, i32
  }
}

</mosaic_0001>

<llo_original>
// kernel: _lstm_forward_sequence.1
$region0: #{_lstm_forward_sequence.1}
  #allocation0 [shape = 'u32[]', space=smem, size = 0x4, offset = 0x4, fixed_abs, tag = 'smem constant byte address 0x4 - core index']
  #allocation1 [shape = 'u32[72,128]{1,0:T(1,128)}', space=vmem, size = 0x9000, scoped, tag = 'internal scratch']
  #allocation2 [shape = 'f32[8,128]{1,0:T(8,128)}', space=vmem, size = 0x1000, scoped, tag = 'scratch operand']
  #allocation3 [shape = 'f32[8,512]{1,0:T(8,128)}', space=vmem, size = 0x4000, scoped, tag = 'scratch operand']
  %s0 = inlined_call_operand.vmem [shape: f32[8,128], index: 0, kind: input, shape index: {}, may-alias: {0,14}]
  %s1 = inlined_call_operand.vmem [shape: f32[8,128], index: 1, kind: input, shape index: {}, may-alias: {1,15}]
  %s2 = inlined_call_operand.vmem [shape: f32[8,512], index: 2, kind: input, shape index: {}, may-alias: {2,16}]
  %s3 = inlined_call_operand.vmem [shape: f32[8,128], index: 3, kind: input, shape index: {}]
  %s4 = inlined_call_operand.hbm [shape: bf16[256,512], index: 4, kind: input, shape index: {}]
  %s5 = inlined_call_operand.vmem [shape: f32[1,512], index: 5, kind: input, shape index: {}]
  %s6 = inlined_call_operand.hbm [shape: bf16[128,128], index: 6, kind: input, shape index: {}]
  %s7 = inlined_call_operand.vmem [shape: f32[1,128], index: 7, kind: input, shape index: {}]
  %s8 = inlined_call_operand.hbm [shape: bf16[128,128], index: 8, kind: input, shape index: {}]
  %s9 = inlined_call_operand.vmem [shape: f32[1,128], index: 9, kind: input, shape index: {}]
  %s10 = inlined_call_operand.hbm [shape: bf16[128,128], index: 10, kind: input, shape index: {}]
  %s11 = inlined_call_operand.vmem [shape: f32[1,128], index: 11, kind: input, shape index: {}]
  %s12 = inlined_call_operand.hbm [shape: bf16[128,512], index: 12, kind: input, shape index: {}]
  %s13 = inlined_call_operand.vmem [shape: f32[1,512], index: 13, kind: input, shape index: {}]
  %s14 = inlined_call_operand.vmem [shape: f32[8,128], index: 14, kind: output, shape index: {0}, may-alias: {0,14}]
  %s15 = inlined_call_operand.vmem [shape: f32[8,128], index: 15, kind: output, shape index: {1}, may-alias: {1,15}]
  %s16 = inlined_call_operand.vmem [shape: f32[8,512], index: 16, kind: output, shape index: {2}, may-alias: {2,16}]
  %s17 = inlined_call_operand.vmem [shape: f32[8,128], index: 17, kind: output, shape index: {3}]
  %s18 = inlined_call_operand.vmem [shape: f32[8,512], index: 18, kind: output, shape index: {4}]
  %19 = xla_tuple %s14, %s15, %s16, %s17, %s18
  %s20 = sld [smem:[#allocation0]]
  $region122: #{_lstm_forward_sequence.1} parent=0
    _
  %s22 = ssub.s32 1, %s20
  %s23 = scalar_select 0, %s22, %s20
  $region1: #{_lstm_forward_sequence.1} parent=0
    #allocation4 [shape = 'u8[262144]{0}', space=vmem, size = 0x40000, scoped, tag = 'input window, operand 4, single buffered']
    #allocation5 [shape = 's32[1]{0}', space=sflag, size = 0x4, scoped, tag = 'scoped memory for _lstm_forward_sequence.1']
    #allocation6 [shape = 'u8[32768]{0}', space=vmem, size = 0x8000, scoped, tag = 'input window, operand 6, single buffered']
    #allocation7 [shape = 's32[1]{0}', space=sflag, size = 0x4, scoped, tag = 'scoped memory for _lstm_forward_sequence.1']
    #allocation8 [shape = 'u8[32768]{0}', space=vmem, size = 0x8000, scoped, tag = 'input window, operand 8, single buffered']
    #allocation9 [shape = 'u8[32768]{0}', space=vmem, size = 0x8000, scoped, tag = 'input window, operand 10, single buffered']
    #allocation10 [shape = 's32[1]{0}', space=sflag, size = 0x4, scoped, tag = 'scoped memory for _lstm_forward_sequence.1']
    #allocation11 [shape = 'u8[131072]{0}', space=vmem, size = 0x20000, scoped, tag = 'input window, operand 12, single buffered']
    %24 = vsyncpa [#allocation5], 0
    %25 = vsyncpa [#allocation7], 0
    %26 = vsyncpa [#allocation10], 0
    // Predicated region
    $region2: #{_lstm_forward_sequence.1} parent=1 // pred_check
      _
    $region3: #{_lstm_forward_sequence.1} parent=1 // pred_check_branch
      %28 = sbr.rel (0) target = $region5
    $region4: #{_lstm_forward_sequence.1} parent=1 // pred_region
      _
    $region5: #{_lstm_forward_sequence.1} parent=1 // pred_fallthru
      _
    // Predicated region
    $region6: #{_lstm_forward_sequence.1} parent=1 // pred_check
      _
    $region7: #{_lstm_forward_sequence.1} parent=1 // pred_check_branch
      %30 = sbr.rel (0) target = $region9
    $region8: #{_lstm_forward_sequence.1} parent=1 // pred_region
      _
    $region9: #{_lstm_forward_sequence.1} parent=1 // pred_fallthru
      _
    // Predicated region
    $region10: #{_lstm_forward_sequence.1} parent=1 // pred_check
      _
    $region11: #{_lstm_forward_sequence.1} parent=1 // pred_check_branch
      %32 = sbr.rel (0) target = $region13
    $region12: #{_lstm_forward_sequence.1} parent=1 // pred_region
      _
    $region13: #{_lstm_forward_sequence.1} parent=1 // pred_fallthru
      _
    // Predicated region
    $region14: #{_lstm_forward_sequence.1} parent=1 // pred_check
      _
    $region15: #{_lstm_forward_sequence.1} parent=1 // pred_check_branch
      %34 = sbr.rel (0) target = $region17
    $region16: #{_lstm_forward_sequence.1} parent=1 // pred_region
      _
    $region17: #{_lstm_forward_sequence.1} parent=1 // pred_fallthru
      _
    // Predicated region
    $region18: #{_lstm_forward_sequence.1} parent=1 // pred_check
      _
    $region19: #{_lstm_forward_sequence.1} parent=1 // pred_check_branch
      %36 = sbr.rel (0) target = $region21
    $region20: #{_lstm_forward_sequence.1} parent=1 // pred_region
      %38 = vsyncadd [#allocation5], 0
      %s39 = sshll.u32 %s4, 4
      %s40 = int_to_ptr.hbm [resolvable:$true] %s39
      %s41 = sshll.u32 [#allocation4], 4
      %s42 = int_to_ptr.vmem [resolvable:$true] %s41
      %47 = dma.hbm_to_vmem [thread:$0]  %s40, 8192, %s42, [#allocation5], 256, 256, 16
    $region21: #{_lstm_forward_sequence.1} parent=1 // pred_fallthru
      _
    // Predicated region
    $region22: #{_lstm_forward_sequence.1} parent=1 // pred_check
      _
    $region23: #{_lstm_forward_sequence.1} parent=1 // pred_check_branch
      %49 = sbr.rel (0) target = $region25
    $region24: #{_lstm_forward_sequence.1} parent=1 // pred_region
      _
    $region25: #{_lstm_forward_sequence.1} parent=1 // pred_fallthru
      _
    // Predicated region
    $region26: #{_lstm_forward_sequence.1} parent=1 // pred_check
      _
    $region27: #{_lstm_forward_sequence.1} parent=1 // pred_check_branch
      %51 = sbr.rel (0) target = $region29
    $region28: #{_lstm_forward_sequence.1} parent=1 // pred_region
      %53 = vsyncadd [#allocation7], 0
      %s54 = sshll.u32 %s6, 4
      %s55 = int_to_ptr.hbm [resolvable:$true] %s54
      %s56 = sshll.u32 [#allocation6], 4
      %s57 = int_to_ptr.vmem [resolvable:$true] %s56
      %62 = dma.hbm_to_vmem [thread:$0]  %s55, 1024, %s57, [#allocation7], 64, 64, 4
    $region29: #{_lstm_forward_sequence.1} parent=1 // pred_fallthru
      _
    // Predicated region
    $region30: #{_lstm_forward_sequence.1} parent=1 // pred_check
      _
    $region31: #{_lstm_forward_sequence.1} parent=1 // pred_check_branch
      %64 = sbr.rel (0) target = $region33
    $region32: #{_lstm_forward_sequence.1} parent=1 // pred_region
      _
    $region33: #{_lstm_forward_sequence.1} parent=1 // pred_fallthru
      _
    // Predicated region
    $region34: #{_lstm_forward_sequence.1} parent=1 // pred_check
      _
    $region35: #{_lstm_forward_sequence.1} parent=1 // pred_check_branch
      %66 = sbr.rel (0) target = $region37
    $region36: #{_lstm_forward_sequence.1} parent=1 // pred_region
      %68 = vsyncadd [#allocation7], 0
      %s69 = sshll.u32 %s8, 4
      %s70 = int_to_ptr.hbm [resolvable:$true] %s69
      %s71 = sshll.u32 [#allocation8], 4
      %s72 = int_to_ptr.vmem [resolvable:$true] %s71
      %77 = dma.hbm_to_vmem [thread:$0]  %s70, 1024, %s72, [#allocation7], 64, 64, 4
    $region37: #{_lstm_forward_sequence.1} parent=1 // pred_fallthru
      _
    // Predicated region
    $region38: #{_lstm_forward_sequence.1} parent=1 // pred_check
      _
    $region39: #{_lstm_forward_sequence.1} parent=1 // pred_check_branch
      %79 = sbr.rel (0) target = $region41
    $region40: #{_lstm_forward_sequence.1} parent=1 // pred_region
      _
    $region41: #{_lstm_forward_sequence.1} parent=1 // pred_fallthru
      _
    // Predicated region
    $region42: #{_lstm_forward_sequence.1} parent=1 // pred_check
      _
    $region43: #{_lstm_forward_sequence.1} parent=1 // pred_check_branch
      %81 = sbr.rel (0) target = $region45
    $region44: #{_lstm_forward_sequence.1} parent=1 // pred_region
      %83 = vsyncadd [#allocation10], 0
      %s84 = sshll.u32 %s10, 4
      %s85 = int_to_ptr.hbm [resolvable:$true] %s84
      %s86 = sshll.u32 [#allocation9], 4
      %s87 = int_to_ptr.vmem [resolvable:$true] %s86
      %92 = dma.hbm_to_vmem [thread:$0]  %s85, 1024, %s87, [#allocation10], 64, 64, 4
    $region45: #{_lstm_forward_sequence.1} parent=1 // pred_fallthru
      _
    // Predicated region
    $region46: #{_lstm_forward_sequence.1} parent=1 // pred_check
      _
    $region47: #{_lstm_forward_sequence.1} parent=1 // pred_check_branch
      %94 = sbr.rel (0) target = $region49
    $region48: #{_lstm_forward_sequence.1} parent=1 // pred_region
      _
    $region49: #{_lstm_forward_sequence.1} parent=1 // pred_fallthru
      _
    // Predicated region
    $region50: #{_lstm_forward_sequence.1} parent=1 // pred_check
      _
    $region51: #{_lstm_forward_sequence.1} parent=1 // pred_check_branch
      %96 = sbr.rel (0) target = $region53
    $region52: #{_lstm_forward_sequence.1} parent=1 // pred_region
      %98 = vsyncadd [#allocation10], 0
      %s99 = sshll.u32 %s12, 4
      %s100 = int_to_ptr.hbm [resolvable:$true] %s99
      %s101 = sshll.u32 [#allocation11], 4
      %s102 = int_to_ptr.vmem [resolvable:$true] %s101
      %107 = dma.hbm_to_vmem [thread:$0]  %s100, 4096, %s102, [#allocation10], 256, 256, 16
    $region53: #{_lstm_forward_sequence.1} parent=1 // pred_fallthru
      _
    // Predicated region
    $region54: #{_lstm_forward_sequence.1} parent=1 // pred_check
      _
    $region55: #{_lstm_forward_sequence.1} parent=1 // pred_check_branch
      %109 = sbr.rel (0) target = $region57
    $region56: #{_lstm_forward_sequence.1} parent=1 // pred_region
      _
    $region57: #{_lstm_forward_sequence.1} parent=1 // pred_fallthru
      _
    // Predicated region
    $region58: #{_lstm_forward_sequence.1} parent=1 // pred_check
      _
    $region59: #{_lstm_forward_sequence.1} parent=1 // pred_check_branch
      %111 = sbr.rel (0) target = $region61
    $region60: #{_lstm_forward_sequence.1} parent=1 // pred_region
      %113 = dma.done [#allocation5], 8192
    $region61: #{_lstm_forward_sequence.1} parent=1 // pred_fallthru
      _
    // Predicated region
    $region62: #{_lstm_forward_sequence.1} parent=1 // pred_check
      _
    $region63: #{_lstm_forward_sequence.1} parent=1 // pred_check_branch
      %115 = sbr.rel (0) target = $region65
    $region64: #{_lstm_forward_sequence.1} parent=1 // pred_region
      %117 = dma.done [#allocation7], 1024
    $region65: #{_lstm_forward_sequence.1} parent=1 // pred_fallthru
      _
    // Predicated region
    $region66: #{_lstm_forward_sequence.1} parent=1 // pred_check
      _
    $region67: #{_lstm_forward_sequence.1} parent=1 // pred_check_branch
      %119 = sbr.rel (0) target = $region69
    $region68: #{_lstm_forward_sequence.1} parent=1 // pred_region
      %121 = dma.done [#allocation7], 1024
    $region69: #{_lstm_forward_sequence.1} parent=1 // pred_fallthru
      _
    // Predicated region
    $region70: #{_lstm_forward_sequence.1} parent=1 // pred_check
      _
    $region71: #{_lstm_forward_sequence.1} parent=1 // pred_check_branch
      %123 = sbr.rel (0) target = $region73
    $region72: #{_lstm_forward_sequence.1} parent=1 // pred_region
      %125 = dma.done [#allocation10], 1024
    $region73: #{_lstm_forward_sequence.1} parent=1 // pred_fallthru
      _
    // Predicated region
    $region74: #{_lstm_forward_sequence.1} parent=1 // pred_check
      _
    $region75: #{_lstm_forward_sequence.1} parent=1 // pred_check_branch
      %127 = sbr.rel (0) target = $region77
    $region76: #{_lstm_forward_sequence.1} parent=1 // pred_region
      %129 = dma.done [#allocation10], 4096
    $region77: #{_lstm_forward_sequence.1} parent=1 // pred_fallthru
      _
    %p130 = scmp.eq.s32.totalorder 0, 0
    // Predicated region
    $region78: #{_lstm_forward_sequence.1} parent=1 // pred_check
      %p131 = pneg %p130
    $region79: #{_lstm_forward_sequence.1} parent=1 // pred_check_branch
      %133 = sbr.rel (%p131) target = $region81
    $region80: #{_lstm_forward_sequence.1} parent=1 // pred_region
      %v134 = vld [vmem:[%s0] sm:$0xff]
      %135 = vst [vmem:[%s14] sm:$0xff] %v134
      %v136 = vld [vmem:[%s1] sm:$0xff]
      %137 = vst [vmem:[%s15] sm:$0xff] %v136
      %v138 = vld [vmem:[%s2] sm:$0xff]
      %v139 = vld [vmem:[%s2 + $0x8] sm:$0xff]
      %v140 = vld [vmem:[%s2 + $0x10] sm:$0xff]
      %v141 = vld [vmem:[%s2 + $0x18] sm:$0xff]
      %142 = vst [vmem:[%s16] sm:$0xff] %v138
      %143 = vst [vmem:[%s16 + $0x8] sm:$0xff] %v139
      %144 = vst [vmem:[%s16 + $0x10] sm:$0xff] %v140
      %145 = vst [vmem:[%s16 + $0x18] sm:$0xff] %v141
    $region81: #{_lstm_forward_sequence.1} parent=1 // pred_fallthru
      _
    %v146 = vld [vmem:[#allocation4] sm:$0xff]
    %v147 = vld [vmem:[#allocation4 + $0x8] sm:$0xff]
    %v148 = vld [vmem:[#allocation4 + $0x10] sm:$0xff]
    %v149 = vld [vmem:[#allocation4 + $0x18] sm:$0xff]
    %v150 = vld [vmem:[#allocation4 + $0x20] sm:$0xff]
    %v151 = vld [vmem:[#allocation4 + $0x28] sm:$0xff]
    %v152 = vld [vmem:[#allocation4 + $0x30] sm:$0xff]
    %v153 = vld [vmem:[#allocation4 + $0x38] sm:$0xff]
    %v154 = vld [vmem:[#allocation4 + $0x40] sm:$0xff]
    %v155 = vld [vmem:[#allocation4 + $0x48] sm:$0xff]
    %v156 = vld [vmem:[#allocation4 + $0x50] sm:$0xff]
    %v157 = vld [vmem:[#allocation4 + $0x58] sm:$0xff]
    %v158 = vld [vmem:[#allocation4 + $0x60] sm:$0xff]
    %v159 = vld [vmem:[#allocation4 + $0x68] sm:$0xff]
    %v160 = vld [vmem:[#allocation4 + $0x70] sm:$0xff]
    %v161 = vld [vmem:[#allocation4 + $0x78] sm:$0xff]
    %v162 = vld [vmem:[#allocation4 + $0x80] sm:$0xff]
    %v163 = vld [vmem:[#allocation4 + $0x88] sm:$0xff]
    %v164 = vld [vmem:[#allocation4 + $0x90] sm:$0xff]
    %v165 = vld [vmem:[#allocation4 + $0x98] sm:$0xff]
    %v166 = vld [vmem:[#allocation4 + $0xa0] sm:$0xff]
    %v167 = vld [vmem:[#allocation4 + $0xa8] sm:$0xff]
    %v168 = vld [vmem:[#allocation4 + $0xb0] sm:$0xff]
    %v169 = vld [vmem:[#allocation4 + $0xb8] sm:$0xff]
    %v170 = vld [vmem:[#allocation4 + $0xc0] sm:$0xff]
    %v171 = vld [vmem:[#allocation4 + $0xc8] sm:$0xff]
    %v172 = vld [vmem:[#allocation4 + $0xd0] sm:$0xff]
    %v173 = vld [vmem:[#allocation4 + $0xd8] sm:$0xff]
    %v174 = vld [vmem:[#allocation4 + $0xe0] sm:$0xff]
    %v175 = vld [vmem:[#allocation4 + $0xe8] sm:$0xff]
    %v176 = vld [vmem:[#allocation4 + $0xf0] sm:$0xff]
    %v177 = vld [vmem:[#allocation4 + $0xf8] sm:$0xff]
    %v178 = vld [vmem:[#allocation4 + $0x100] sm:$0xff]
    %v179 = vld [vmem:[#allocation4 + $0x108] sm:$0xff]
    %v180 = vld [vmem:[#allocation4 + $0x110] sm:$0xff]
    %v181 = vld [vmem:[#allocation4 + $0x118] sm:$0xff]
    %v182 = vld [vmem:[#allocation4 + $0x120] sm:$0xff]
    %v183 = vld [vmem:[#allocation4 + $0x128] sm:$0xff]
    %v184 = vld [vmem:[#allocation4 + $0x130] sm:$0xff]
    %v185 = vld [vmem:[#allocation4 + $0x138] sm:$0xff]
    %v186 = vld [vmem:[#allocation4 + $0x140] sm:$0xff]
    %v187 = vld [vmem:[#allocation4 + $0x148] sm:$0xff]
    %v188 = vld [vmem:[#allocation4 + $0x150] sm:$0xff]
    %v189 = vld [vmem:[#allocation4 + $0x158] sm:$0xff]
    %v190 = vld [vmem:[#allocation4 + $0x160] sm:$0xff]
    %v191 = vld [vmem:[#allocation4 + $0x168] sm:$0xff]
    %v192 = vld [vmem:[#allocation4 + $0x170] sm:$0xff]
    %v193 = vld [vmem:[#allocation4 + $0x178] sm:$0xff]
    %v194 = vld [vmem:[#allocation4 + $0x180] sm:$0xff]
    %v195 = vld [vmem:[#allocation4 + $0x188] sm:$0xff]
    %v196 = vld [vmem:[#allocation4 + $0x190] sm:$0xff]
    %v197 = vld [vmem:[#allocation4 + $0x198] sm:$0xff]
    %v198 = vld [vmem:[#allocation4 + $0x1a0] sm:$0xff]
    %v199 = vld [vmem:[#allocation4 + $0x1a8] sm:$0xff]
    %v200 = vld [vmem:[#allocation4 + $0x1b0] sm:$0xff]
    %v201 = vld [vmem:[#allocation4 + $0x1b8] sm:$0xff]
    %v202 = vld [vmem:[#allocation4 + $0x1c0] sm:$0xff]
    %v203 = vld [vmem:[#allocation4 + $0x1c8] sm:$0xff]
    %v204 = vld [vmem:[#allocation4 + $0x1d0] sm:$0xff]
    %v205 = vld [vmem:[#allocation4 + $0x1d8] sm:$0xff]
    %v206 = vld [vmem:[#allocation4 + $0x1e0] sm:$0xff]
    %v207 = vld [vmem:[#allocation4 + $0x1e8] sm:$0xff]
    %v208 = vld [vmem:[#allocation4 + $0x1f0] sm:$0xff]
    %v209 = vld [vmem:[#allocation4 + $0x1f8] sm:$0xff]
    %v210 = vld [vmem:[%s5] sm:$0xf]
    %v211 = vld [vmem:[%s14] sm:$0xff]
    %v212 = vld [vmem:[%s15] sm:$0xff]
    %v213 = vld [vmem:[%s16] sm:$0xff]
    %v214 = vld [vmem:[%s16 + $0x8] sm:$0xff]
    %v215 = vld [vmem:[%s16 + $0x10] sm:$0xff]
    %v216 = vld [vmem:[%s3] sm:$0xff]
    %v217 = vpack.c.bf16 %v216, %v216
    %v218 = vpack.c.bf16 %v211, %v211
    %v220 = vperm.slane %v210, 0
    %v221 = vperm.slane %v210, 1
    %v222 = vperm.slane %v210, 2
    %v223 = vperm.slane %v210, 3
    %v292 = vunpack.c.l.b16 %v146
    %v293 = vunpack.c.h.b16 %v146
    %v294 = vunpack.c.l.b16 %v147
    %v295 = vunpack.c.h.b16 %v147
    %v296 = vunpack.c.l.b16 %v148
    %v297 = vunpack.c.h.b16 %v148
    %v298 = vunpack.c.l.b16 %v149
    %v299 = vunpack.c.h.b16 %v149
    %v300 = vunpack.c.l.b16 %v150
    %v301 = vunpack.c.h.b16 %v150
    %v302 = vunpack.c.l.b16 %v151
    %v303 = vunpack.c.h.b16 %v151
    %v304 = vunpack.c.l.b16 %v152
    %v305 = vunpack.c.h.b16 %v152
    %v306 = vunpack.c.l.b16 %v153
    %v307 = vunpack.c.h.b16 %v153
    %v308 = vunpack.c.l.b16 %v154
    %v309 = vunpack.c.h.b16 %v154
    %v310 = vunpack.c.l.b16 %v155
    %v311 = vunpack.c.h.b16 %v155
    %v312 = vunpack.c.l.b16 %v156
    %v313 = vunpack.c.h.b16 %v156
    %v314 = vunpack.c.l.b16 %v157
    %v315 = vunpack.c.h.b16 %v157
    %v316 = vunpack.c.l.b16 %v158
    %v317 = vunpack.c.h.b16 %v158
    %v318 = vunpack.c.l.b16 %v159
    %v319 = vunpack.c.h.b16 %v159
    %v320 = vunpack.c.l.b16 %v160
    %v321 = vunpack.c.h.b16 %v160
    %v322 = vunpack.c.l.b16 %v161
    %v323 = vunpack.c.h.b16 %v161
    %v324 = vunpack.c.l.b16 %v162
    %v325 = vunpack.c.h.b16 %v162
    %v326 = vunpack.c.l.b16 %v163
    %v327 = vunpack.c.h.b16 %v163
    %v328 = vunpack.c.l.b16 %v164
    %v329 = vunpack.c.h.b16 %v164
    %v330 = vunpack.c.l.b16 %v165
    %v331 = vunpack.c.h.b16 %v165
    %v332 = vunpack.c.l.b16 %v166
    %v333 = vunpack.c.h.b16 %v166
    %v334 = vunpack.c.l.b16 %v167
    %v335 = vunpack.c.h.b16 %v167
    %v336 = vunpack.c.l.b16 %v168
    %v337 = vunpack.c.h.b16 %v168
    %v338 = vunpack.c.l.b16 %v169
    %v339 = vunpack.c.h.b16 %v169
    %v340 = vunpack.c.l.b16 %v170
    %v341 = vunpack.c.h.b16 %v170
    %v342 = vunpack.c.l.b16 %v171
    %v343 = vunpack.c.h.b16 %v171
    %v344 = vunpack.c.l.b16 %v172
    %v345 = vunpack.c.h.b16 %v172
    %v346 = vunpack.c.l.b16 %v173
    %v347 = vunpack.c.h.b16 %v173
    %v348 = vunpack.c.l.b16 %v174
    %v349 = vunpack.c.h.b16 %v174
    %v350 = vunpack.c.l.b16 %v175
    %v351 = vunpack.c.h.b16 %v175
    %v352 = vunpack.c.l.b16 %v176
    %v353 = vunpack.c.h.b16 %v176
    %v354 = vunpack.c.l.b16 %v177
    %v355 = vunpack.c.h.b16 %v177
    %v356 = vunpack.c.l.b16 %v178
    %v357 = vunpack.c.h.b16 %v178
    %v358 = vunpack.c.l.b16 %v179
    %v359 = vunpack.c.h.b16 %v179
    %v360 = vunpack.c.l.b16 %v180
    %v361 = vunpack.c.h.b16 %v180
    %v362 = vunpack.c.l.b16 %v181
    %v363 = vunpack.c.h.b16 %v181
    %v364 = vunpack.c.l.b16 %v182
    %v365 = vunpack.c.h.b16 %v182
    %v366 = vunpack.c.l.b16 %v183
    %v367 = vunpack.c.h.b16 %v183
    %v368 = vunpack.c.l.b16 %v184
    %v369 = vunpack.c.h.b16 %v184
    %v370 = vunpack.c.l.b16 %v185
    %v371 = vunpack.c.h.b16 %v185
    %v372 = vunpack.c.l.b16 %v186
    %v373 = vunpack.c.h.b16 %v186
    %v374 = vunpack.c.l.b16 %v187
    %v375 = vunpack.c.h.b16 %v187
    %v376 = vunpack.c.l.b16 %v188
    %v377 = vunpack.c.h.b16 %v188
    %v378 = vunpack.c.l.b16 %v189
    %v379 = vunpack.c.h.b16 %v189
    %v380 = vunpack.c.l.b16 %v190
    %v381 = vunpack.c.h.b16 %v190
    %v382 = vunpack.c.l.b16 %v191
    %v383 = vunpack.c.h.b16 %v191
    %v384 = vunpack.c.l.b16 %v192
    %v385 = vunpack.c.h.b16 %v192
    %v386 = vunpack.c.l.b16 %v193
    %v387 = vunpack.c.h.b16 %v193
    %v388 = vunpack.c.l.b16 %v194
    %v389 = vunpack.c.h.b16 %v194
    %v390 = vunpack.c.l.b16 %v195
    %v391 = vunpack.c.h.b16 %v195
    %v392 = vunpack.c.l.b16 %v196
    %v393 = vunpack.c.h.b16 %v196
    %v394 = vunpack.c.l.b16 %v197
    %v395 = vunpack.c.h.b16 %v197
    %v396 = vunpack.c.l.b16 %v198
    %v397 = vunpack.c.h.b16 %v198
    %v398 = vunpack.c.l.b16 %v199
    %v399 = vunpack.c.h.b16 %v199
    %v400 = vunpack.c.l.b16 %v200
    %v401 = vunpack.c.h.b16 %v200
    %v402 = vunpack.c.l.b16 %v201
    %v403 = vunpack.c.h.b16 %v201
    %v404 = vunpack.c.l.b16 %v202
    %v405 = vunpack.c.h.b16 %v202
    %v406 = vunpack.c.l.b16 %v203
    %v407 = vunpack.c.h.b16 %v203
    %v408 = vunpack.c.l.b16 %v204
    %v409 = vunpack.c.h.b16 %v204
    %v410 = vunpack.c.l.b16 %v205
    %v411 = vunpack.c.h.b16 %v205
    %v412 = vunpack.c.l.b16 %v206
    %v413 = vunpack.c.h.b16 %v206
    %v414 = vunpack.c.l.b16 %v207
    %v415 = vunpack.c.h.b16 %v207
    %v416 = vunpack.c.l.b16 %v208
    %v417 = vunpack.c.h.b16 %v208
    %v418 = vunpack.c.l.b16 %v209
    %v419 = vunpack.c.h.b16 %v209
    %v420 = vpack.c.b16 %v296, %v292
    %v421 = vpack.c.b16 %v297, %v293
    %v422 = vpack.c.b16 %v298, %v294
    %v423 = vpack.c.b16 %v299, %v295
    %v424 = vpack.c.b16 %v304, %v300
    %v425 = vpack.c.b16 %v305, %v301
    %v426 = vpack.c.b16 %v306, %v302
    %v427 = vpack.c.b16 %v307, %v303
    %v428 = vpack.c.b16 %v312, %v308
    %v429 = vpack.c.b16 %v313, %v309
    %v430 = vpack.c.b16 %v314, %v310
    %v431 = vpack.c.b16 %v315, %v311
    %v432 = vpack.c.b16 %v320, %v316
    %v433 = vpack.c.b16 %v321, %v317
    %v434 = vpack.c.b16 %v322, %v318
    %v435 = vpack.c.b16 %v323, %v319
    %v436 = vpack.c.b16 %v328, %v324
    %v437 = vpack.c.b16 %v329, %v325
    %v438 = vpack.c.b16 %v330, %v326
    %v439 = vpack.c.b16 %v331, %v327
    %v440 = vpack.c.b16 %v336, %v332
    %v441 = vpack.c.b16 %v337, %v333
    %v442 = vpack.c.b16 %v338, %v334
    %v443 = vpack.c.b16 %v339, %v335
    %v444 = vpack.c.b16 %v344, %v340
    %v445 = vpack.c.b16 %v345, %v341
    %v446 = vpack.c.b16 %v346, %v342
    %v447 = vpack.c.b16 %v347, %v343
    %v448 = vpack.c.b16 %v352, %v348
    %v449 = vpack.c.b16 %v353, %v349
    %v450 = vpack.c.b16 %v354, %v350
    %v451 = vpack.c.b16 %v355, %v351
    %v452 = vpack.c.b16 %v360, %v356
    %v453 = vpack.c.b16 %v361, %v357
    %v454 = vpack.c.b16 %v362, %v358
    %v455 = vpack.c.b16 %v363, %v359
    %v456 = vpack.c.b16 %v368, %v364
    %v457 = vpack.c.b16 %v369, %v365
    %v458 = vpack.c.b16 %v370, %v366
    %v459 = vpack.c.b16 %v371, %v367
    %v460 = vpack.c.b16 %v376, %v372
    %v461 = vpack.c.b16 %v377, %v373
    %v462 = vpack.c.b16 %v378, %v374
    %v463 = vpack.c.b16 %v379, %v375
    %v464 = vpack.c.b16 %v384, %v380
    %v465 = vpack.c.b16 %v385, %v381
    %v466 = vpack.c.b16 %v386, %v382
    %v467 = vpack.c.b16 %v387, %v383
    %v468 = vpack.c.b16 %v392, %v388
    %v469 = vpack.c.b16 %v393, %v389
    %v470 = vpack.c.b16 %v394, %v390
    %v471 = vpack.c.b16 %v395, %v391
    %v472 = vpack.c.b16 %v400, %v396
    %v473 = vpack.c.b16 %v401, %v397
    %v474 = vpack.c.b16 %v402, %v398
    %v475 = vpack.c.b16 %v403, %v399
    %v476 = vpack.c.b16 %v408, %v404
    %v477 = vpack.c.b16 %v409, %v405
    %v478 = vpack.c.b16 %v410, %v406
    %v479 = vpack.c.b16 %v411, %v407
    %v480 = vpack.c.b16 %v416, %v412
    %v481 = vpack.c.b16 %v417, %v413
    %v482 = vpack.c.b16 %v418, %v414
    %v483 = vpack.c.b16 %v419, %v415
    %548 = vmatpush.bf16.msra.mxu0 %v448
    %549 = vmatpush.bf16.msra.mxu0 %v444
    %550 = vmatpush.bf16.msra.mxu0 %v440
    %551 = vmatpush.bf16.msra.mxu0 %v436
    %552 = vmatpush.bf16.msra.mxu0 %v432
    %553 = vmatpush.bf16.msra.mxu0 %v428
    %554 = vmatpush.bf16.msra.mxu0 %v424
    %555 = vmatpush.bf16.msra.mxu0 %v420
    %556 = vmatmul.bf16.gmra.mxu0 %v217
    %v557 = vpop.f32.mrf.mxu0
    %v558 = vadd.f32 %v220, %v557
    %v559 = vpop.f32.mrf.mxu0
    %560 = vdwg.mxu0
    %561 = vmatpush.bf16.msra.mxu0 %v480
    %562 = vmatpush.bf16.msra.mxu0 %v476
    %563 = vmatpush.bf16.msra.mxu0 %v472
    %564 = vmatpush.bf16.msra.mxu0 %v468
    %565 = vmatpush.bf16.msra.mxu0 %v464
    %566 = vmatpush.bf16.msra.mxu0 %v460
    %567 = vmatpush.bf16.msra.mxu0 %v456
    %568 = vmatpush.bf16.msra.mxu0 %v452
    %569 = vmatmul.bf16.gmra.mxu0 %v218
    %v570 = vpop.f32.mrf.mxu0
    %v571 = vadd.f32 %v558, %v570
    %v572 = vpop.f32.mrf.mxu0
    %573 = vdwg.mxu0
    %574 = vmatpush.bf16.msra.mxu0 %v449
    %575 = vmatpush.bf16.msra.mxu0 %v445
    %576 = vmatpush.bf16.msra.mxu0 %v441
    %577 = vmatpush.bf16.msra.mxu0 %v437
    %578 = vmatpush.bf16.msra.mxu0 %v433
    %579 = vmatpush.bf16.msra.mxu0 %v429
    %580 = vmatpush.bf16.msra.mxu0 %v425
    %581 = vmatpush.bf16.msra.mxu0 %v421
    %582 = vmatmul.bf16.gmra.mxu0 %v217
    %v583 = vpop.f32.mrf.mxu0
    %v584 = vadd.f32 %v221, %v583
    %v585 = vpop.f32.mrf.mxu0
    %586 = vdwg.mxu0
    %587 = vmatpush.bf16.msra.mxu0 %v481
    %588 = vmatpush.bf16.msra.mxu0 %v477
    %589 = vmatpush.bf16.msra.mxu0 %v473
    %590 = vmatpush.bf16.msra.mxu0 %v469
    %591 = vmatpush.bf16.msra.mxu0 %v465
    %592 = vmatpush.bf16.msra.mxu0 %v461
    %593 = vmatpush.bf16.msra.mxu0 %v457
    %594 = vmatpush.bf16.msra.mxu0 %v453
    %595 = vmatmul.bf16.gmra.mxu0 %v218
    %v596 = vpop.f32.mrf.mxu0
    %v597 = vadd.f32 %v584, %v596
    %v598 = vpop.f32.mrf.mxu0
    %599 = vdwg.mxu0
    %600 = vmatpush.bf16.msra.mxu0 %v450
    %601 = vmatpush.bf16.msra.mxu0 %v446
    %602 = vmatpush.bf16.msra.mxu0 %v442
    %603 = vmatpush.bf16.msra.mxu0 %v438
    %604 = vmatpush.bf16.msra.mxu0 %v434
    %605 = vmatpush.bf16.msra.mxu0 %v430
    %606 = vmatpush.bf16.msra.mxu0 %v426
    %607 = vmatpush.bf16.msra.mxu0 %v422
    %608 = vmatmul.bf16.gmra.mxu0 %v217
    %v609 = vpop.f32.mrf.mxu0
    %v610 = vadd.f32 %v222, %v609
    %v611 = vpop.f32.mrf.mxu0
    %612 = vdwg.mxu0
    %613 = vmatpush.bf16.msra.mxu0 %v482
    %614 = vmatpush.bf16.msra.mxu0 %v478
    %615 = vmatpush.bf16.msra.mxu0 %v474
    %616 = vmatpush.bf16.msra.mxu0 %v470
    %617 = vmatpush.bf16.msra.mxu0 %v466
    %618 = vmatpush.bf16.msra.mxu0 %v462
    %619 = vmatpush.bf16.msra.mxu0 %v458
    %620 = vmatpush.bf16.msra.mxu0 %v454
    %621 = vmatmul.bf16.gmra.mxu0 %v218
    %v622 = vpop.f32.mrf.mxu0
    %v623 = vadd.f32 %v610, %v622
    %v624 = vpop.f32.mrf.mxu0
    %625 = vdwg.mxu0
    %626 = vmatpush.bf16.msra.mxu0 %v451
    %627 = vmatpush.bf16.msra.mxu0 %v447
    %628 = vmatpush.bf16.msra.mxu0 %v443
    %629 = vmatpush.bf16.msra.mxu0 %v439
    %630 = vmatpush.bf16.msra.mxu0 %v435
    %631 = vmatpush.bf16.msra.mxu0 %v431
    %632 = vmatpush.bf16.msra.mxu0 %v427
    %633 = vmatpush.bf16.msra.mxu0 %v423
    %634 = vmatmul.bf16.gmra.mxu0 %v217
    %v635 = vpop.f32.mrf.mxu0
    %v636 = vadd.f32 %v223, %v635
    %v637 = vpop.f32.mrf.mxu0
    %638 = vdwg.mxu0
    %639 = vmatpush.bf16.msra.mxu0 %v483
    %640 = vmatpush.bf16.msra.mxu0 %v479
    %641 = vmatpush.bf16.msra.mxu0 %v475
    %642 = vmatpush.bf16.msra.mxu0 %v471
    %643 = vmatpush.bf16.msra.mxu0 %v467
    %644 = vmatpush.bf16.msra.mxu0 %v463
    %645 = vmatpush.bf16.msra.mxu0 %v459
    %646 = vmatpush.bf16.msra.mxu0 %v455
    %647 = vmatmul.bf16.gmra.mxu0 %v218
    %v648 = vpop.f32.mrf.mxu0
    %v649 = vadd.f32 %v636, %v648
    %v650 = vpop.f32.mrf.mxu0
    %651 = vdwg.mxu0
    %v652 = vxor.u32 %v571, 2147483648
    %v653 = vxor.u32 %v597, 2147483648
    %v654 = vxor.u32 %v623, 2147483648
    %v655 = vmul.f32 %v652, 1.442695
    %v656 = vpow.pop %v655
    %v657 = vmul.f32 %v653, 1.442695
    %v658 = vpow.pop %v657
    %v659 = vmul.f32 %v654, 1.442695
    %v660 = vpow.pop %v659
    %v661 = vadd.f32 %v656, 1.0
    %v662 = vadd.f32 %v658, 1.0
    %v663 = vadd.f32 %v660, 1.0
    %v664 = vrcp.pop %v661
    %v665 = vmul.f32 %v661, %v664
    %v666 = vsub.f32 1.0, %v665
    %v667 = vmul.f32 %v664, %v666
    %v668 = vadd.f32 %v664, %v667
    %vm669 = vweird.f32 %v661
    %vm670 = vweird.f32 %v664
    %vm671 = vmor %vm669, %vm670
    %v672 = vsel %vm671, %v664, %v668
    %v673 = vand.u32 2147483647, %v661
    %vm674 = vcmp.eq.f32.partialorder %v673, 8.507059e+37
    %v675 = vand.u32 %v661, 2147483648
    %v676 = vor.u32 1.1754944e-38, %v675
    %v677 = vsel %vm674, %v676, %v672
    %v678 = vmul.f32 1.0, %v677
    %v679 = vrcp.pop %v662
    %v680 = vmul.f32 %v662, %v679
    %v681 = vsub.f32 1.0, %v680
    %v682 = vmul.f32 %v679, %v681
    %v683 = vadd.f32 %v679, %v682
    %vm684 = vweird.f32 %v662
    %vm685 = vweird.f32 %v679
    %vm686 = vmor %vm684, %vm685
    %v687 = vsel %vm686, %v679, %v683
    %v688 = vand.u32 2147483647, %v662
    %vm689 = vcmp.eq.f32.partialorder %v688, 8.507059e+37
    %v690 = vand.u32 %v662, 2147483648
    %v691 = vor.u32 1.1754944e-38, %v690
    %v692 = vsel %vm689, %v691, %v687
    %v693 = vmul.f32 1.0, %v692
    %v694 = vrcp.pop %v663
    %v695 = vmul.f32 %v663, %v694
    %v696 = vsub.f32 1.0, %v695
    %v697 = vmul.f32 %v694, %v696
    %v698 = vadd.f32 %v694, %v697
    %vm699 = vweird.f32 %v663
    %vm700 = vweird.f32 %v694
    %vm701 = vmor %vm699, %vm700
    %v702 = vsel %vm701, %v694, %v698
    %v703 = vand.u32 2147483647, %v663
    %vm704 = vcmp.eq.f32.partialorder %v703, 8.507059e+37
    %v705 = vand.u32 %v663, 2147483648
    %v706 = vor.u32 1.1754944e-38, %v705
    %v707 = vsel %vm704, %v706, %v702
    %v708 = vmul.f32 1.0, %v707
    %v709 = vtanh.pop %v649
    %v710 = vmul.f32 %v693, %v212
    %v711 = vmul.f32 %v678, %v709
    %v712 = vadd.f32 %v710, %v711
    %v713 = vtanh.pop %v712
    %v714 = vmul.f32 %v708, %v713
    %715 = vst [vmem:[#allocation2] sm:$0xff] %v714
    %s716 = smul.u32 0, 4
    %s717 = smul.addr %s716, 8
    %s718 = scalar_lea.vmem [#allocation3], %s717
    %719 = vst [vmem:[%s718] sm:$0xff] %v216
    %720 = vst [vmem:[%s718 + $0x8] sm:$0xff] %v213
    %721 = vst [vmem:[%s718 + $0x10] sm:$0xff] %v214
    %722 = vst [vmem:[%s718 + $0x18] sm:$0xff] %v215
    %723 = vst [vmem:[%s14] sm:$0xff] %v714
    %724 = vst [vmem:[%s15] sm:$0xff] %v712
    %725 = vst [vmem:[%s16] sm:$0xff] %v216
    %726 = vst [vmem:[%s16 + $0x8] sm:$0xff] %v213
    %727 = vst [vmem:[%s16 + $0x10] sm:$0xff] %v214
    %728 = vst [vmem:[%s16 + $0x18] sm:$0xff] %v215
    %v729 = vld [vmem:[#allocation2] sm:$0xff]
    %v730 = vld [vmem:[#allocation6] sm:$0xf]
    %v731 = vld [vmem:[#allocation6 + $0x4] sm:$0xf]
    %v732 = vld [vmem:[#allocation6 + $0x8] sm:$0xf]
    %v733 = vld [vmem:[#allocation6 + $0xc] sm:$0xf]
    %v734 = vld [vmem:[#allocation6 + $0x10] sm:$0xf]
    %v735 = vld [vmem:[#allocation6 + $0x14] sm:$0xf]
    %v736 = vld [vmem:[#allocation6 + $0x18] sm:$0xf]
    %v737 = vld [vmem:[#allocation6 + $0x1c] sm:$0xf]
    %v738 = vld [vmem:[#allocation6 + $0x20] sm:$0xf]
    %v739 = vld [vmem:[#allocation6 + $0x24] sm:$0xf]
    %v740 = vld [vmem:[#allocation6 + $0x28] sm:$0xf]
    %v741 = vld [vmem:[#allocation6 + $0x2c] sm:$0xf]
    %v742 = vld [vmem:[#allocation6 + $0x30] sm:$0xf]
    %v743 = vld [vmem:[#allocation6 + $0x34] sm:$0xf]
    %v744 = vld [vmem:[#allocation6 + $0x38] sm:$0xf]
    %v745 = vld [vmem:[#allocation6 + $0x3c] sm:$0xf]
    %v746 = vld [vmem:[%s7] sm:$0x1]
    %v747 = vpack.c.bf16 %v729, %v729
    %v749 = vperm.slane %v746, 0
    %v767 = vunpack.c.l.b16 %v730
    %v768 = vunpack.c.l.b16 %v731
    %v769 = vunpack.c.l.b16 %v732
    %v770 = vunpack.c.l.b16 %v733
    %v771 = vunpack.c.l.b16 %v734
    %v772 = vunpack.c.l.b16 %v735
    %v773 = vunpack.c.l.b16 %v736
    %v774 = vunpack.c.l.b16 %v737
    %v775 = vunpack.c.l.b16 %v738
    %v776 = vunpack.c.l.b16 %v739
    %v777 = vunpack.c.l.b16 %v740
    %v778 = vunpack.c.l.b16 %v741
    %v779 = vunpack.c.l.b16 %v742
    %v780 = vunpack.c.l.b16 %v743
    %v781 = vunpack.c.l.b16 %v744
    %v782 = vunpack.c.l.b16 %v745
    %v783 = vpack.c.b16 %v768, %v767
    %v784 = vpack.c.b16 %v770, %v769
    %v785 = vpack.c.b16 %v772, %v771
    %v786 = vpack.c.b16 %v774, %v773
    %v787 = vpack.c.b16 %v776, %v775
    %v788 = vpack.c.b16 %v778, %v777
    %v789 = vpack.c.b16 %v780, %v779
    %v790 = vpack.c.b16 %v782, %v781
    %799 = vmatpush.bf16.msra.mxu0 %v790
    %800 = vmatpush.bf16.msra.mxu0 %v789
    %801 = vmatpush.bf16.msra.mxu0 %v788
    %802 = vmatpush.bf16.msra.mxu0 %v787
    %803 = vmatpush.bf16.msra.mxu0 %v786
    %804 = vmatpush.bf16.msra.mxu0 %v785
    %805 = vmatpush.bf16.msra.mxu0 %v784
    %806 = vmatpush.bf16.msra.mxu0 %v783
    %807 = vmatmul.bf16.gmra.mxu0 %v747
    %v808 = vpop.f32.mrf.mxu0
    %v809 = vadd.f32 %v749, %v808
    %v810 = vpop.f32.mrf.mxu0
    %811 = vdwg.mxu0
    %v812 = vmax.f32 %v809, 0.0
    %v813 = vld [vmem:[#allocation8] sm:$0xf]
    %v814 = vld [vmem:[#allocation8 + $0x4] sm:$0xf]
    %v815 = vld [vmem:[#allocation8 + $0x8] sm:$0xf]
    %v816 = vld [vmem:[#allocation8 + $0xc] sm:$0xf]
    %v817 = vld [vmem:[#allocation8 + $0x10] sm:$0xf]
    %v818 = vld [vmem:[#allocation8 + $0x14] sm:$0xf]
    %v819 = vld [vmem:[#allocation8 + $0x18] sm:$0xf]
    %v820 = vld [vmem:[#allocation8 + $0x1c] sm:$0xf]
    %v821 = vld [vmem:[#allocation8 + $0x20] sm:$0xf]
    %v822 = vld [vmem:[#allocation8 + $0x24] sm:$0xf]
    %v823 = vld [vmem:[#allocation8 + $0x28] sm:$0xf]
    %v824 = vld [vmem:[#allocation8 + $0x2c] sm:$0xf]
    %v825 = vld [vmem:[#allocation8 + $0x30] sm:$0xf]
    %v826 = vld [vmem:[#allocation8 + $0x34] sm:$0xf]
    %v827 = vld [vmem:[#allocation8 + $0x38] sm:$0xf]
    %v828 = vld [vmem:[#allocation8 + $0x3c] sm:$0xf]
    %v829 = vld [vmem:[%s9] sm:$0x1]
    %v830 = vpack.c.bf16 %v812, %v812
    %v832 = vperm.slane %v829, 0
    %v850 = vunpack.c.l.b16 %v813
    %v851 = vunpack.c.l.b16 %v814
    %v852 = vunpack.c.l.b16 %v815
    %v853 = vunpack.c.l.b16 %v816
    %v854 = vunpack.c.l.b16 %v817
    %v855 = vunpack.c.l.b16 %v818
    %v856 = vunpack.c.l.b16 %v819
    %v857 = vunpack.c.l.b16 %v820
    %v858 = vunpack.c.l.b16 %v821
    %v859 = vunpack.c.l.b16 %v822
    %v860 = vunpack.c.l.b16 %v823
    %v861 = vunpack.c.l.b16 %v824
    %v862 = vunpack.c.l.b16 %v825
    %v863 = vunpack.c.l.b16 %v826
    %v864 = vunpack.c.l.b16 %v827
    %v865 = vunpack.c.l.b16 %v828
    %v866 = vpack.c.b16 %v851, %v850
    %v867 = vpack.c.b16 %v853, %v852
    %v868 = vpack.c.b16 %v855, %v854
    %v869 = vpack.c.b16 %v857, %v856
    %v870 = vpack.c.b16 %v859, %v858
    %v871 = vpack.c.b16 %v861, %v860
    %v872 = vpack.c.b16 %v863, %v862
    %v873 = vpack.c.b16 %v865, %v864
    %882 = vmatpush.bf16.msra.mxu0 %v873
    %883 = vmatpush.bf16.msra.mxu0 %v872
    %884 = vmatpush.bf16.msra.mxu0 %v871
    %885 = vmatpush.bf16.msra.mxu0 %v870
    %886 = vmatpush.bf16.msra.mxu0 %v869
    %887 = vmatpush.bf16.msra.mxu0 %v868
    %888 = vmatpush.bf16.msra.mxu0 %v867
    %889 = vmatpush.bf16.msra.mxu0 %v866
    %890 = vmatmul.bf16.gmra.mxu0 %v830
    %v891 = vpop.f32.mrf.mxu0
    %v892 = vadd.f32 %v832, %v891
    %v893 = vpop.f32.mrf.mxu0
    %894 = vdwg.mxu0
    %895 = vst [vmem:[%s17] sm:$0xff] %v892
    %v896 = vld [vmem:[#allocation9] sm:$0xf]
    %v897 = vld [vmem:[#allocation9 + $0x4] sm:$0xf]
    %v898 = vld [vmem:[#allocation9 + $0x8] sm:$0xf]
    %v899 = vld [vmem:[#allocation9 + $0xc] sm:$0xf]
    %v900 = vld [vmem:[#allocation9 + $0x10] sm:$0xf]
    %v901 = vld [vmem:[#allocation9 + $0x14] sm:$0xf]
    %v902 = vld [vmem:[#allocation9 + $0x18] sm:$0xf]
    %v903 = vld [vmem:[#allocation9 + $0x1c] sm:$0xf]
    %v904 = vld [vmem:[#allocation9 + $0x20] sm:$0xf]
    %v905 = vld [vmem:[#allocation9 + $0x24] sm:$0xf]
    %v906 = vld [vmem:[#allocation9 + $0x28] sm:$0xf]
    %v907 = vld [vmem:[#allocation9 + $0x2c] sm:$0xf]
    %v908 = vld [vmem:[#allocation9 + $0x30] sm:$0xf]
    %v909 = vld [vmem:[#allocation9 + $0x34] sm:$0xf]
    %v910 = vld [vmem:[#allocation9 + $0x38] sm:$0xf]
    %v911 = vld [vmem:[#allocation9 + $0x3c] sm:$0xf]
    %v912 = vld [vmem:[%s11] sm:$0x1]
    %v913 = vpack.c.bf16 %v892, %v892
    %v915 = vperm.slane %v912, 0
    %v933 = vunpack.c.l.b16 %v896
    %v934 = vunpack.c.l.b16 %v897
    %v935 = vunpack.c.l.b16 %v898
    %v936 = vunpack.c.l.b16 %v899
    %v937 = vunpack.c.l.b16 %v900
    %v938 = vunpack.c.l.b16 %v901
    %v939 = vunpack.c.l.b16 %v902
    %v940 = vunpack.c.l.b16 %v903
    %v941 = vunpack.c.l.b16 %v904
    %v942 = vunpack.c.l.b16 %v905
    %v943 = vunpack.c.l.b16 %v906
    %v944 = vunpack.c.l.b16 %v907
    %v945 = vunpack.c.l.b16 %v908
    %v946 = vunpack.c.l.b16 %v909
    %v947 = vunpack.c.l.b16 %v910
    %v948 = vunpack.c.l.b16 %v911
    %v949 = vpack.c.b16 %v934, %v933
    %v950 = vpack.c.b16 %v936, %v935
    %v951 = vpack.c.b16 %v938, %v937
    %v952 = vpack.c.b16 %v940, %v939
    %v953 = vpack.c.b16 %v942, %v941
    %v954 = vpack.c.b16 %v944, %v943
    %v955 = vpack.c.b16 %v946, %v945
    %v956 = vpack.c.b16 %v948, %v947
    %965 = vmatpush.bf16.msra.mxu0 %v956
    %966 = vmatpush.bf16.msra.mxu0 %v955
    %967 = vmatpush.bf16.msra.mxu0 %v954
    %968 = vmatpush.bf16.msra.mxu0 %v953
    %969 = vmatpush.bf16.msra.mxu0 %v952
    %970 = vmatpush.bf16.msra.mxu0 %v951
    %971 = vmatpush.bf16.msra.mxu0 %v950
    %972 = vmatpush.bf16.msra.mxu0 %v949
    %973 = vmatmul.bf16.gmra.mxu0 %v913
    %v974 = vpop.f32.mrf.mxu0
    %v975 = vadd.f32 %v915, %v974
    %v976 = vpop.f32.mrf.mxu0
    %977 = vdwg.mxu0
    %v978 = vmax.f32 %v975, 0.0
    %v979 = vld [vmem:[#allocation11] sm:$0xff]
    %v980 = vld [vmem:[#allocation11 + $0x8] sm:$0xff]
    %v981 = vld [vmem:[#allocation11 + $0x10] sm:$0xff]
    %v982 = vld [vmem:[#allocation11 + $0x18] sm:$0xff]
    %v983 = vld [vmem:[#allocation11 + $0x20] sm:$0xff]
    %v984 = vld [vmem:[#allocation11 + $0x28] sm:$0xff]
    %v985 = vld [vmem:[#allocation11 + $0x30] sm:$0xff]
    %v986 = vld [vmem:[#allocation11 + $0x38] sm:$0xff]
    %v987 = vld [vmem:[#allocation11 + $0x40] sm:$0xff]
    %v988 = vld [vmem:[#allocation11 + $0x48] sm:$0xff]
    %v989 = vld [vmem:[#allocation11 + $0x50] sm:$0xff]
    %v990 = vld [vmem:[#allocation11 + $0x58] sm:$0xff]
    %v991 = vld [vmem:[#allocation11 + $0x60] sm:$0xff]
    %v992 = vld [vmem:[#allocation11 + $0x68] sm:$0xff]
    %v993 = vld [vmem:[#allocation11 + $0x70] sm:$0xff]
    %v994 = vld [vmem:[#allocation11 + $0x78] sm:$0xff]
    %v995 = vld [vmem:[#allocation11 + $0x80] sm:$0xff]
    %v996 = vld [vmem:[#allocation11 + $0x88] sm:$0xff]
    %v997 = vld [vmem:[#allocation11 + $0x90] sm:$0xff]
    %v998 = vld [vmem:[#allocation11 + $0x98] sm:$0xff]
    %v999 = vld [vmem:[#allocation11 + $0xa0] sm:$0xff]
    %v1000 = vld [vmem:[#allocation11 + $0xa8] sm:$0xff]
    %v1001 = vld [vmem:[#allocation11 + $0xb0] sm:$0xff]
    %v1002 = vld [vmem:[#allocation11 + $0xb8] sm:$0xff]
    %v1003 = vld [vmem:[#allocation11 + $0xc0] sm:$0xff]
    %v1004 = vld [vmem:[#allocation11 + $0xc8] sm:$0xff]
    %v1005 = vld [vmem:[#allocation11 + $0xd0] sm:$0xff]
    %v1006 = vld [vmem:[#allocation11 + $0xd8] sm:$0xff]
    %v1007 = vld [vmem:[#allocation11 + $0xe0] sm:$0xff]
    %v1008 = vld [vmem:[#allocation11 + $0xe8] sm:$0xff]
    %v1009 = vld [vmem:[#allocation11 + $0xf0] sm:$0xff]
    %v1010 = vld [vmem:[#allocation11 + $0xf8] sm:$0xff]
    %v1011 = vld [vmem:[%s13] sm:$0xf]
    %v1012 = vpack.c.bf16 %v978, %v978
    %v1014 = vperm.slane %v1011, 0
    %v1015 = vperm.slane %v1011, 1
    %v1016 = vperm.slane %v1011, 2
    %v1017 = vperm.slane %v1011, 3
    %v1054 = vunpack.c.l.b16 %v979
    %v1055 = vunpack.c.h.b16 %v979
    %v1056 = vunpack.c.l.b16 %v980
    %v1057 = vunpack.c.h.b16 %v980
    %v1058 = vunpack.c.l.b16 %v981
    %v1059 = vunpack.c.h.b16 %v981
    %v1060 = vunpack.c.l.b16 %v982
    %v1061 = vunpack.c.h.b16 %v982
    %v1062 = vunpack.c.l.b16 %v983
    %v1063 = vunpack.c.h.b16 %v983
    %v1064 = vunpack.c.l.b16 %v984
    %v1065 = vunpack.c.h.b16 %v984
    %v1066 = vunpack.c.l.b16 %v985
    %v1067 = vunpack.c.h.b16 %v985
    %v1068 = vunpack.c.l.b16 %v986
    %v1069 = vunpack.c.h.b16 %v986
    %v1070 = vunpack.c.l.b16 %v987
    %v1071 = vunpack.c.h.b16 %v987
    %v1072 = vunpack.c.l.b16 %v988
    %v1073 = vunpack.c.h.b16 %v988
    %v1074 = vunpack.c.l.b16 %v989
    %v1075 = vunpack.c.h.b16 %v989
    %v1076 = vunpack.c.l.b16 %v990
    %v1077 = vunpack.c.h.b16 %v990
    %v1078 = vunpack.c.l.b16 %v991
    %v1079 = vunpack.c.h.b16 %v991
    %v1080 = vunpack.c.l.b16 %v992
    %v1081 = vunpack.c.h.b16 %v992
    %v1082 = vunpack.c.l.b16 %v993
    %v1083 = vunpack.c.h.b16 %v993
    %v1084 = vunpack.c.l.b16 %v994
    %v1085 = vunpack.c.h.b16 %v994
    %v1086 = vunpack.c.l.b16 %v995
    %v1087 = vunpack.c.h.b16 %v995
    %v1088 = vunpack.c.l.b16 %v996
    %v1089 = vunpack.c.h.b16 %v996
    %v1090 = vunpack.c.l.b16 %v997
    %v1091 = vunpack.c.h.b16 %v997
    %v1092 = vunpack.c.l.b16 %v998
    %v1093 = vunpack.c.h.b16 %v998
    %v1094 = vunpack.c.l.b16 %v999
    %v1095 = vunpack.c.h.b16 %v999
    %v1096 = vunpack.c.l.b16 %v1000
    %v1097 = vunpack.c.h.b16 %v1000
    %v1098 = vunpack.c.l.b16 %v1001
    %v1099 = vunpack.c.h.b16 %v1001
    %v1100 = vunpack.c.l.b16 %v1002
    %v1101 = vunpack.c.h.b16 %v1002
    %v1102 = vunpack.c.l.b16 %v1003
    %v1103 = vunpack.c.h.b16 %v1003
    %v1104 = vunpack.c.l.b16 %v1004
    %v1105 = vunpack.c.h.b16 %v1004
    %v1106 = vunpack.c.l.b16 %v1005
    %v1107 = vunpack.c.h.b16 %v1005
    %v1108 = vunpack.c.l.b16 %v1006
    %v1109 = vunpack.c.h.b16 %v1006
    %v1110 = vunpack.c.l.b16 %v1007
    %v1111 = vunpack.c.h.b16 %v1007
    %v1112 = vunpack.c.l.b16 %v1008
    %v1113 = vunpack.c.h.b16 %v1008
    %v1114 = vunpack.c.l.b16 %v1009
    %v1115 = vunpack.c.h.b16 %v1009
    %v1116 = vunpack.c.l.b16 %v1010
    %v1117 = vunpack.c.h.b16 %v1010
    %v1118 = vpack.c.b16 %v1058, %v1054
    %v1119 = vpack.c.b16 %v1059, %v1055
    %v1120 = vpack.c.b16 %v1060, %v1056
    %v1121 = vpack.c.b16 %v1061, %v1057
    %v1122 = vpack.c.b16 %v1066, %v1062
    %v1123 = vpack.c.b16 %v1067, %v1063
    %v1124 = vpack.c.b16 %v1068, %v1064
    %v1125 = vpack.c.b16 %v1069, %v1065
    %v1126 = vpack.c.b16 %v1074, %v1070
    %v1127 = vpack.c.b16 %v1075, %v1071
    %v1128 = vpack.c.b16 %v1076, %v1072
    %v1129 = vpack.c.b16 %v1077, %v1073
    %v1130 = vpack.c.b16 %v1082, %v1078
    %v1131 = vpack.c.b16 %v1083, %v1079
    %v1132 = vpack.c.b16 %v1084, %v1080
    %v1133 = vpack.c.b16 %v1085, %v1081
    %v1134 = vpack.c.b16 %v1090, %v1086
    %v1135 = vpack.c.b16 %v1091, %v1087
    %v1136 = vpack.c.b16 %v1092, %v1088
    %v1137 = vpack.c.b16 %v1093, %v1089
    %v1138 = vpack.c.b16 %v1098, %v1094
    %v1139 = vpack.c.b16 %v1099, %v1095
    %v1140 = vpack.c.b16 %v1100, %v1096
    %v1141 = vpack.c.b16 %v1101, %v1097
    %v1142 = vpack.c.b16 %v1106, %v1102
    %v1143 = vpack.c.b16 %v1107, %v1103
    %v1144 = vpack.c.b16 %v1108, %v1104
    %v1145 = vpack.c.b16 %v1109, %v1105
    %v1146 = vpack.c.b16 %v1114, %v1110
    %v1147 = vpack.c.b16 %v1115, %v1111
    %v1148 = vpack.c.b16 %v1116, %v1112
    %v1149 = vpack.c.b16 %v1117, %v1113
    %1182 = vmatpush.bf16.msra.mxu0 %v1146
    %1183 = vmatpush.bf16.msra.mxu0 %v1142
    %1184 = vmatpush.bf16.msra.mxu0 %v1138
    %1185 = vmatpush.bf16.msra.mxu0 %v1134
    %1186 = vmatpush.bf16.msra.mxu0 %v1130
    %1187 = vmatpush.bf16.msra.mxu0 %v1126
    %1188 = vmatpush.bf16.msra.mxu0 %v1122
    %1189 = vmatpush.bf16.msra.mxu0 %v1118
    %1190 = vmatmul.bf16.gmra.mxu0 %v1012
    %v1191 = vpop.f32.mrf.mxu0
    %v1192 = vadd.f32 %v1014, %v1191
    %v1193 = vpop.f32.mrf.mxu0
    %1194 = vdwg.mxu0
    %1195 = vmatpush.bf16.msra.mxu0 %v1147
    %1196 = vmatpush.bf16.msra.mxu0 %v1143
    %1197 = vmatpush.bf16.msra.mxu0 %v1139
    %1198 = vmatpush.bf16.msra.mxu0 %v1135
    %1199 = vmatpush.bf16.msra.mxu0 %v1131
    %1200 = vmatpush.bf16.msra.mxu0 %v1127
    %1201 = vmatpush.bf16.msra.mxu0 %v1123
    %1202 = vmatpush.bf16.msra.mxu0 %v1119
    %1203 = vmatmul.bf16.gmra.mxu0 %v1012
    %v1204 = vpop.f32.mrf.mxu0
    %v1205 = vadd.f32 %v1015, %v1204
    %v1206 = vpop.f32.mrf.mxu0
    %1207 = vdwg.mxu0
    %1208 = vmatpush.bf16.msra.mxu0 %v1148
    %1209 = vmatpush.bf16.msra.mxu0 %v1144
    %1210 = vmatpush.bf16.msra.mxu0 %v1140
    %1211 = vmatpush.bf16.msra.mxu0 %v1136
    %1212 = vmatpush.bf16.msra.mxu0 %v1132
    %1213 = vmatpush.bf16.msra.mxu0 %v1128
    %1214 = vmatpush.bf16.msra.mxu0 %v1124
    %1215 = vmatpush.bf16.msra.mxu0 %v1120
    %1216 = vmatmul.bf16.gmra.mxu0 %v1012
    %v1217 = vpop.f32.mrf.mxu0
    %v1218 = vadd.f32 %v1016, %v1217
    %v1219 = vpop.f32.mrf.mxu0
    %1220 = vdwg.mxu0
    %1221 = vmatpush.bf16.msra.mxu0 %v1149
    %1222 = vmatpush.bf16.msra.mxu0 %v1145
    %1223 = vmatpush.bf16.msra.mxu0 %v1141
    %1224 = vmatpush.bf16.msra.mxu0 %v1137
    %1225 = vmatpush.bf16.msra.mxu0 %v1133
    %1226 = vmatpush.bf16.msra.mxu0 %v1129
    %1227 = vmatpush.bf16.msra.mxu0 %v1125
    %1228 = vmatpush.bf16.msra.mxu0 %v1121
    %1229 = vmatmul.bf16.gmra.mxu0 %v1012
    %v1230 = vpop.f32.mrf.mxu0
    %v1231 = vadd.f32 %v1017, %v1230
    %v1232 = vpop.f32.mrf.mxu0
    %1233 = vdwg.mxu0
    %v1234 = vld [vmem:[#allocation3] sm:$0xff]
    %v1235 = vld [vmem:[#allocation3 + $0x8] sm:$0xff]
    %v1236 = vld [vmem:[#allocation3 + $0x10] sm:$0xff]
    %v1237 = vld [vmem:[#allocation3 + $0x18] sm:$0xff]
    %v1238 = vsub.f32 %v1192, %v1234
    %v1239 = vsub.f32 %v1205, %v1235
    %v1240 = vsub.f32 %v1218, %v1236
    %v1241 = vsub.f32 %v1231, %v1237
    %1242 = vst [vmem:[%s18] sm:$0xff] %v1238
    %1243 = vst [vmem:[%s18 + $0x8] sm:$0xff] %v1239
    %1244 = vst [vmem:[%s18 + $0x10] sm:$0xff] %v1240
    %1245 = vst [vmem:[%s18 + $0x18] sm:$0xff] %v1241
    // Predicated region
    $region82: #{_lstm_forward_sequence.1} parent=1 // pred_check
      _
    $region83: #{_lstm_forward_sequence.1} parent=1 // pred_check_branch
      %1247 = sbr.rel (0) target = $region85
    $region84: #{_lstm_forward_sequence.1} parent=1 // pred_region
      _
    $region85: #{_lstm_forward_sequence.1} parent=1 // pred_fallthru
      _
    // Predicated region
    $region86: #{_lstm_forward_sequence.1} parent=1 // pred_check
      _
    $region87: #{_lstm_forward_sequence.1} parent=1 // pred_check_branch
      %1249 = sbr.rel (0) target = $region89
    $region88: #{_lstm_forward_sequence.1} parent=1 // pred_region
      _
    $region89: #{_lstm_forward_sequence.1} parent=1 // pred_fallthru
      _
    // Predicated region
    $region90: #{_lstm_forward_sequence.1} parent=1 // pred_check
      _
    $region91: #{_lstm_forward_sequence.1} parent=1 // pred_check_branch
      %1251 = sbr.rel (0) target = $region93
    $region92: #{_lstm_forward_sequence.1} parent=1 // pred_region
      _
    $region93: #{_lstm_forward_sequence.1} parent=1 // pred_fallthru
      _
    // Predicated region
    $region94: #{_lstm_forward_sequence.1} parent=1 // pred_check
      _
    $region95: #{_lstm_forward_sequence.1} parent=1 // pred_check_branch
      %1253 = sbr.rel (0) target = $region97
    $region96: #{_lstm_forward_sequence.1} parent=1 // pred_region
      _
    $region97: #{_lstm_forward_sequence.1} parent=1 // pred_fallthru
      _
    // Predicated region
    $region98: #{_lstm_forward_sequence.1} parent=1 // pred_check
      _
    $region99: #{_lstm_forward_sequence.1} parent=1 // pred_check_branch
      %1255 = sbr.rel (0) target = $region101
    $region100: #{_lstm_forward_sequence.1} parent=1 // pred_region
      _
    $region101: #{_lstm_forward_sequence.1} parent=1 // pred_fallthru
      _
    // Predicated region
    $region102: #{_lstm_forward_sequence.1} parent=1 // pred_check
      _
    $region103: #{_lstm_forward_sequence.1} parent=1 // pred_check_branch
      %1257 = sbr.rel (0) target = $region105
    $region104: #{_lstm_forward_sequence.1} parent=1 // pred_region
      _
    $region105: #{_lstm_forward_sequence.1} parent=1 // pred_fallthru
      _
    // Predicated region
    $region106: #{_lstm_forward_sequence.1} parent=1 // pred_check
      _
    $region107: #{_lstm_forward_sequence.1} parent=1 // pred_check_branch
      %1259 = sbr.rel (0) target = $region109
    $region108: #{_lstm_forward_sequence.1} parent=1 // pred_region
      _
    $region109: #{_lstm_forward_sequence.1} parent=1 // pred_fallthru
      _
    // Predicated region
    $region110: #{_lstm_forward_sequence.1} parent=1 // pred_check
      _
    $region111: #{_lstm_forward_sequence.1} parent=1 // pred_check_branch
      %1261 = sbr.rel (0) target = $region113
    $region112: #{_lstm_forward_sequence.1} parent=1 // pred_region
      _
    $region113: #{_lstm_forward_sequence.1} parent=1 // pred_fallthru
      _
    // Predicated region
    $region114: #{_lstm_forward_sequence.1} parent=1 // pred_check
      _
    $region115: #{_lstm_forward_sequence.1} parent=1 // pred_check_branch
      %1263 = sbr.rel (0) target = $region117
    $region116: #{_lstm_forward_sequence.1} parent=1 // pred_region
      _
    $region117: #{_lstm_forward_sequence.1} parent=1 // pred_fallthru
      _
    // Predicated region
    $region118: #{_lstm_forward_sequence.1} parent=1 // pred_check
      _
    $region119: #{_lstm_forward_sequence.1} parent=1 // pred_check_branch
      %1265 = sbr.rel (0) target = $region121
    $region120: #{_lstm_forward_sequence.1} parent=1 // pred_region
      _
    $region121: #{_lstm_forward_sequence.1} parent=1 // pred_fallthru
      _
    %1266 = vsyncpa [#allocation5], 1
    %1267 = vsyncpa [#allocation7], 1
    %1268 = vsyncpa [#allocation10], 1

</llo_original>
